<compile_context>
chip_gen: v7x
topology: tpu7x:2x2x1
jax: 0.10.0
libtpu: 0.0.40
codegen_flags: <defaults>
</compile_context>

<pallas_src>
import functools

import jax
import jax.numpy as jnp
from jax import lax
from jax.experimental import pallas as pl
from jax.experimental.pallas import tpu as pltpu


def _round_up(v, m):
    return ((v + m - 1) // m) * m


def _pick_vmem_limit():
    """~3/4 of this generation's physical VMEM, capped at 96 MiB, floor 32 MiB."""
    try:
        cap = int(pltpu.get_tpu_info().vmem_capacity_bytes)
    except Exception:  # conservative fallback if the query is unavailable
        cap = 64 * 1024 * 1024
    return max(32 * 1024 * 1024, min(96 * 1024 * 1024, cap * 3 // 4))


def _choose_d_tile(D, HW, C, n_taps, patch_itemsize, padl, budget_bytes):
    """Largest D-tile whose im2col scratch fits the budget; prefers >= 2 tiles for pipelining."""
    valid = []
    for dt in range(1, D + 1):
        if D % dt:
            continue
        tile_s = dt * HW
        # Tiled path needs lane-dense tiles and a halo no wider than one tile.
        if dt != D and (tile_s % 128 != 0 or tile_s < padl):
            continue
        valid.append(dt)
    if not valid:
        return D
    fits = [dt for dt in valid if n_taps * C * dt * HW * patch_itemsize <= budget_bytes]
    multi = [dt for dt in fits if D // dt >= 2]
    if multi:
        return max(multi)
    if fits:
        return max(fits)
    return min(valid)


def _invariant_spec(block_shape, index_map):
    """Grid-invariant operand: single VMEM buffer (skip pointless double-buffering)."""
    try:
        return pl.BlockSpec(block_shape, index_map, pipeline_mode=pl.Buffered(1))
    except Exception:  # older jax without pipeline_mode / Buffered(1): fall back to default
        return pl.BlockSpec(block_shape, index_map)


def _make_res_kernel(deltas, padl, tile_s, n_dt):
    """deltas: static per-tap flattened-lane shifts; padl: lane halo width; tile_s: Dt*H*W."""

    def kernel(xp_ref, xm_ref, xn_ref, scale_ref, shift_ref, w_ref, b_ref, mask_ref,
               o_ref, hpad_ref, patches_ref):
        # xp/xm/xn_ref: (Cin, tile_s)   previous / current / next D-tile of one batch element
        # scale_ref:    (Cin, 1)        folded BN scale = gamma / sqrt(var + eps)
        # shift_ref:    (Cin, 1)        folded BN shift = beta - mean * scale
        # w_ref:        (Cout, 27*Cin)  conv weight, tap-major / Cin-minor
        # b_ref:        (Cout, 1)       conv bias (f32)
        # mask_ref:     (27, tile_s)    {0,1} boundary-validity mask per tap for this tile (f32)
        # o_ref:        (Cout, tile_s)  output tile
        # hpad_ref:     (Cin, tile_s + 2*padl)  lane-padded BN+ReLU staging scratch (f32)
        # patches_ref:  (27*Cin, tile_s)        im2col patch matrix
        cin = xm_ref.shape[0]
        t = pl.program_id(1)

        scale = scale_ref[...]
        shift = shift_ref[...]

        def bn_relu(v):
            return jnp.maximum(v.astype(jnp.float32) * scale + shift, 0.0)

        # Interior: BN+ReLU the current tile once into the staging scratch.
        hpad_ref[:, padl:padl + tile_s] = bn_relu(xm_ref[...])

        if n_dt == 1:
            # Single tile: both halos are outside the volume -> zero (masks also zero them).
            hpad_ref[:, :padl] = jnp.zeros((cin, padl), hpad_ref.dtype)
            hpad_ref[:, padl + tile_s:] = jnp.zeros((cin, padl), hpad_ref.dtype)
        else:
            # Left halo: trailing lanes of the previous tile (zero at the volume's leading edge).
            @pl.when(t == 0)
            def _():
                hpad_ref[:, :padl] = jnp.zeros((cin, padl), hpad_ref.dtype)

            @pl.when(t > 0)
            def _():
                hpad_ref[:, :padl] = bn_relu(xp_ref[:, tile_s - padl:])

            # Right halo: leading lanes of the next tile (zero at the volume's trailing edge).
            @pl.when(t == n_dt - 1)
            def _():
                hpad_ref[:, padl + tile_s:] = jnp.zeros((cin, padl), hpad_ref.dtype)

            @pl.when(t < n_dt - 1)
            def _():
                hpad_ref[:, padl + tile_s:] = bn_relu(xn_ref[:, :padl])

        # im2col: one static lane-shifted, boundary-masked copy per tap.  All elementwise math
        # stays in f32 (v5e has no bf16 VALU path); cast only on the sublane-aligned store.
        for tap, delta in enumerate(deltas):
            shifted = hpad_ref[:, padl + delta: padl + delta + tile_s]
            masked = shifted * mask_ref[tap:tap + 1, :]
            patches_ref[tap * cin:(tap + 1) * cin, :] = masked.astype(patches_ref.dtype)

        # Single MXU matmul contracting over the fused (27*Cin) axis, f32 accumulation.
        acc = jnp.dot(w_ref[...], patches_ref[...], preferred_element_type=jnp.float32)

        # Bias + residual on the current tile.
        out = acc + b_ref[...] + xm_ref[...].astype(jnp.float32)
        o_ref[...] = out.astype(o_ref.dtype)

    return kernel


@functools.partial(
    jax.jit,
    static_argnames=("kernel_size", "padding", "dilation", "eps", "compute_dtype"))
def res_module_forward(x, gamma, beta, weight, bias, *, kernel_size=3, padding=1,
                       dilation=1, eps=1e-5, compute_dtype=jnp.bfloat16):
    """ResModule forward: Conv3d(relu(BN3d(x))) + x.  x: (N, C, D, H, W) NCDHW."""
    N, C, D, H, W = x.shape
    Co = weight.shape[0]
    K = kernel_size
    assert weight.shape == (Co, C, K, K, K)
    assert Co == C, "residual add requires in_channels == out_channels"
    # The residual add (and the lane-shift im2col) require a same-size convolution.
    assert 2 * padding == dilation * (K - 1), (
        "ResModule needs a same-size conv: 2*padding == dilation*(kernel_size-1)")
    HW = H * W
    S = D * HW

    xs = x.reshape(N, C, S)                      # contiguous reshape, stays in NCDHW order

    # ---- plain-JAX glue: training-mode BN batch stats, two-pass (no cancellation) ----
    mean = jnp.mean(xs, axis=(0, 2))
    var = jnp.mean(jnp.square(xs - mean[None, :, None]), axis=(0, 2))
    scale = gamma / jnp.sqrt(var + eps)
    shift = beta - mean * scale
    scale2 = scale.astype(jnp.float32).reshape(C, 1)
    shift2 = shift.astype(jnp.float32).reshape(C, 1)

    # im2col / matmul dtype: bf16 only if every tap store is fully sublane-aligned under bf16's
    # (16,128) packing (C % 16 == 0); otherwise f32 (C % 8 == 0 aligns f32's (8,128) tiles).
    packing = 4 // jnp.dtype(compute_dtype).itemsize
    patch_dtype = compute_dtype if (C % (8 * packing) == 0) else jnp.float32

    # Conv weight -> (Cout, 27*Cin), tap-major / Cin-minor.
    n_taps = K * K * K
    w_mat = jnp.transpose(weight, (0, 2, 3, 4, 1)).reshape(Co, n_taps * C).astype(patch_dtype)
    b2 = bias.astype(jnp.float32).reshape(Co, 1)

    # Static per-tap flattened-lane shifts + {0,1} boundary masks (2-D: taps x S, lane-dense).
    off = [k * dilation - padding for k in range(K)]
    p = jnp.arange(S, dtype=jnp.int32)
    d_i, h_i, w_i = p // HW, (p // W) % H, p % W
    deltas, mask_rows = [], []
    for od in off:
        for oh in off:
            for ow in off:
                deltas.append(od * HW + oh * W + ow)
                ok = ((d_i + od >= 0) & (d_i + od < D) &
                      (h_i + oh >= 0) & (h_i + oh < H) &
                      (w_i + ow >= 0) & (w_i + ow < W))
                mask_rows.append(ok)
    masks = jnp.stack(mask_rows).astype(jnp.float32)          # (n_taps, S)

    maxd = max(abs(d) for d in deltas)
    padl = _round_up(max(maxd, 1), 128)

    vmem_limit = _pick_vmem_limit()
    dt = _choose_d_tile(D, HW, C, n_taps, jnp.dtype(patch_dtype).itemsize, padl,
                        budget_bytes=vmem_limit // 3)
    tile_s = dt * HW
    n_dt = D // dt

    kernel = _make_res_kernel(tuple(deltas), padl, tile_s, n_dt)

    x_mid_map = lambda n, t: (n, 0, t)
    x_prev_map = lambda n, t: (n, 0, jnp.maximum(t - 1, 0))
    x_next_map = lambda n, t: (n, 0, jnp.minimum(t + 1, n_dt - 1))
    const_map = lambda n, t: (0, 0)

    out = pl.pallas_call(
        kernel,
        out_shape=jax.ShapeDtypeStruct((N, Co, S), x.dtype),
        grid=(N, n_dt),
        in_specs=[
            pl.BlockSpec((None, C, tile_s), x_prev_map),
            pl.BlockSpec((None, C, tile_s), x_mid_map),
            pl.BlockSpec((None, C, tile_s), x_next_map),
            _invariant_spec((C, 1), const_map),
            _invariant_spec((C, 1), const_map),
            _invariant_spec((Co, n_taps * C), const_map),
            _invariant_spec((Co, 1), const_map),
            pl.BlockSpec((n_taps, tile_s), lambda n, t: (0, t)),
        ],
        out_specs=pl.BlockSpec((None, Co, tile_s), lambda n, t: (n, 0, t)),
        scratch_shapes=[
            pltpu.VMEM((C, tile_s + 2 * padl), jnp.float32),   # lane-padded BN+ReLU staging
            pltpu.VMEM((n_taps * C, tile_s), patch_dtype),     # im2col patch matrix (per tile)
        ],
        compiler_params=pltpu.CompilerParams(
            dimension_semantics=("parallel", "parallel"),      # batch x D-tile across TCs
            vmem_limit_bytes=vmem_limit,
        ),
    )(xs, xs, xs, scale2, shift2, w_mat, b2, masks)

    return out.reshape(N, Co, D, H, W)


def ref_forward(x, gamma, beta, w, bias, eps=1e-5):
    """Pure-JAX reference mirroring the PyTorch module (training-mode BN)."""
    mean = x.mean(axis=(0, 2, 3, 4), keepdims=True)
    var = ((x - mean) ** 2).mean(axis=(0, 2, 3, 4), keepdims=True)
    g = gamma.reshape(1, -1, 1, 1, 1)
    b = beta.reshape(1, -1, 1, 1, 1)
    h = jax.nn.relu((x - mean) / jnp.sqrt(var + eps) * g + b)
    conv = lax.conv_general_dilated(
        h, w, window_strides=(1, 1, 1),
        padding=((1, 1), (1, 1), (1, 1)),
        dimension_numbers=("NCDHW", "OIDHW", "NCDHW"),
    )
    return conv + bias.reshape(1, -1, 1, 1, 1) + x


if __name__ == "__main__":
    # Small shapes consistent with the module (in_channels == out_channels for the residual).
    N, C, D, H, W = 2, 8, 8, 8, 8
    K = 3

    key = jax.random.PRNGKey(0)
    kx, kg, kb, kw_, kbi = jax.random.split(key, 5)
    x = jax.random.normal(kx, (N, C, D, H, W), dtype=jnp.float32)
    gamma = jax.random.uniform(kg, (C,), jnp.float32, minval=0.5, maxval=1.5)
    beta = 0.1 * jax.random.normal(kb, (C,), dtype=jnp.float32)
    w = jax.random.normal(kw_, (C, C, K, K, K), dtype=jnp.float32) / jnp.sqrt(C * K * K * K)
    bias = 0.1 * jax.random.normal(kbi, (C,), dtype=jnp.float32)

    out = jax.block_until_ready(res_module_forward(x, gamma, beta, w, bias))
    ref = jax.block_until_ready(ref_forward(x, gamma, beta, w, bias))

    assert out.shape == (N, C, D, H, W), out.shape
    max_err = float(jnp.max(jnp.abs(out - ref)))
    # At C=8 the im2col/matmul run in f32 (alignment rule), so the error should be tiny;
    # keep a tolerance that also covers the bf16 path used when C % 16 == 0.
    assert max_err < 1e-2, f"max abs error too large: {max_err}"

    print("KERNEL_OK")
</pallas_src>

<mosaic_0001>
module attributes {stable_mosaic.version = 11 : i64} {
  func.func @kernel(%arg0: i32, %arg1: i32, %arg2: memref<1x8x256xf32, #tpu.memory_space<vmem>>, %arg3: memref<1x8x256xf32, #tpu.memory_space<vmem>>, %arg4: memref<1x8x256xf32, #tpu.memory_space<vmem>>, %arg5: memref<8x1xf32, #tpu.memory_space<vmem>>, %arg6: memref<8x1xf32, #tpu.memory_space<vmem>>, %arg7: memref<8x216xf32, #tpu.memory_space<vmem>>, %arg8: memref<8x1xf32, #tpu.memory_space<vmem>>, %arg9: memref<27x256xf32, #tpu.memory_space<vmem>>, %arg10: memref<1x8x256xf32, #tpu.memory_space<vmem>>, %arg11: memref<8x512xf32, #tpu.memory_space<vmem>>, %arg12: memref<216x256xf32, #tpu.memory_space<vmem>>) attributes {dimension_semantics = [#tpu.dimension_semantics<parallel>, #tpu.dimension_semantics<parallel>], iteration_bounds = array<i64: 2, 2>, scalar_prefetch = 0 : i64, scratch_operands = 2 : i64, tpu.core_type = #tpu.core_type<tc>, window_params = [{transform_indices = @transform_0, window_bounds = array<i64: 1, 8, 256>}, {transform_indices = @transform_1, window_bounds = array<i64: 1, 8, 256>}, {transform_indices = @transform_2, window_bounds = array<i64: 1, 8, 256>}, {pipeline_mode = #tpu.pipeline_mode<synchronous>, transform_indices = @transform_3, window_bounds = array<i64: 8, 1>}, {pipeline_mode = #tpu.pipeline_mode<synchronous>, transform_indices = @transform_4, window_bounds = array<i64: 8, 1>}, {pipeline_mode = #tpu.pipeline_mode<synchronous>, transform_indices = @transform_5, window_bounds = array<i64: 8, 216>}, {pipeline_mode = #tpu.pipeline_mode<synchronous>, transform_indices = @transform_6, window_bounds = array<i64: 8, 1>}, {transform_indices = @transform_7, window_bounds = array<i64: 27, 256>}, {transform_indices = @transform_8, window_bounds = array<i64: 1, 8, 256>}]} {
    %c0 = arith.constant 0 : index
    %c0_0 = arith.constant 0 : index
    %0 = vector.load %arg5[%c0, %c0_0] : memref<8x1xf32, #tpu.memory_space<vmem>>, vector<8x1xf32>
    %c0_1 = arith.constant 0 : index
    %c0_2 = arith.constant 0 : index
    %1 = vector.load %arg6[%c0_1, %c0_2] : memref<8x1xf32, #tpu.memory_space<vmem>>, vector<8x1xf32>
    %c0_3 = arith.constant 0 : index
    %c0_4 = arith.constant 0 : index
    %c0_5 = arith.constant 0 : index
    %2 = vector.load %arg3[%c0_3, %c0_4, %c0_5] : memref<1x8x256xf32, #tpu.memory_space<vmem>>, vector<1x8x256xf32>
    %3 = vector.shape_cast %2 : vector<1x8x256xf32> to vector<8x256xf32>
    %4 = vector.broadcast %0 : vector<8x1xf32> to vector<8x256xf32>
    %5 = arith.mulf %3, %4 : vector<8x256xf32>
    %6 = vector.broadcast %1 : vector<8x1xf32> to vector<8x256xf32>
    %7 = arith.addf %5, %6 : vector<8x256xf32>
    %cst = arith.constant 0.000000e+00 : f32
    %8 = vector.broadcast %cst : f32 to vector<8x256xf32>
    %9 = arith.maximumf %7, %8 : vector<8x256xf32>
    %c0_6 = arith.constant 0 : index
    %c128 = arith.constant 128 : index
    %10 = vector.load %arg11[%c0_6, %c128] : memref<8x512xf32, #tpu.memory_space<vmem>>, vector<8x256xf32>
    tpu.vector_store %arg11[%c0_6, %c128], %9 {strides = array<i32>} : memref<8x512xf32, #tpu.memory_space<vmem>>, vector<8x256xf32>,
    %c0_i32 = arith.constant 0 : i32
    %11 = arith.cmpi eq, %arg1, %c0_i32 : i32
    %12 = arith.extui %11 : i1 to i32
    %c0_i32_7 = arith.constant 0 : i32
    %13 = arith.cmpi ne, %12, %c0_i32_7 : i32
    scf.if %13 {
      %cst_122 = arith.constant 0.000000e+00 : f32
      %170 = vector.broadcast %cst_122 : f32 to vector<8x128xf32>
      %c0_123 = arith.constant 0 : index
      %c0_124 = arith.constant 0 : index
      %171 = vector.load %arg11[%c0_123, %c0_124] : memref<8x512xf32, #tpu.memory_space<vmem>>, vector<8x128xf32>
      tpu.vector_store %arg11[%c0_123, %c0_124], %170 {strides = array<i32>} : memref<8x512xf32, #tpu.memory_space<vmem>>, vector<8x128xf32>,
    } else {
    }
    %c0_i32_8 = arith.constant 0 : i32
    %14 = arith.cmpi sgt, %arg1, %c0_i32_8 : i32
    %15 = arith.extui %14 : i1 to i32
    %c0_i32_9 = arith.constant 0 : i32
    %16 = arith.cmpi ne, %15, %c0_i32_9 : i32
    scf.if %16 {
      %c0_122 = arith.constant 0 : index
      %c0_123 = arith.constant 0 : index
      %c128_124 = arith.constant 128 : index
      %170 = vector.load %arg2[%c0_122, %c0_123, %c128_124] : memref<1x8x256xf32, #tpu.memory_space<vmem>>, vector<1x8x128xf32>
      %171 = vector.shape_cast %170 : vector<1x8x128xf32> to vector<8x128xf32>
      %172 = vector.broadcast %0 : vector<8x1xf32> to vector<8x128xf32>
      %173 = arith.mulf %171, %172 : vector<8x128xf32>
      %174 = vector.broadcast %1 : vector<8x1xf32> to vector<8x128xf32>
      %175 = arith.addf %173, %174 : vector<8x128xf32>
      %cst_125 = arith.constant 0.000000e+00 : f32
      %176 = vector.broadcast %cst_125 : f32 to vector<8x128xf32>
      %177 = arith.maximumf %175, %176 : vector<8x128xf32>
      %c0_126 = arith.constant 0 : index
      %c0_127 = arith.constant 0 : index
      %178 = vector.load %arg11[%c0_126, %c0_127] : memref<8x512xf32, #tpu.memory_space<vmem>>, vector<8x128xf32>
      tpu.vector_store %arg11[%c0_126, %c0_127], %177 {strides = array<i32>} : memref<8x512xf32, #tpu.memory_space<vmem>>, vector<8x128xf32>,
    } else {
    }
    %c1_i32 = arith.constant 1 : i32
    %17 = arith.cmpi eq, %arg1, %c1_i32 : i32
    %18 = arith.extui %17 : i1 to i32
    %c0_i32_10 = arith.constant 0 : i32
    %19 = arith.cmpi ne, %18, %c0_i32_10 : i32
    scf.if %19 {
      %cst_122 = arith.constant 0.000000e+00 : f32
      %170 = vector.broadcast %cst_122 : f32 to vector<8x128xf32>
      %c0_123 = arith.constant 0 : index
      %c384 = arith.constant 384 : index
      %171 = vector.load %arg11[%c0_123, %c384] : memref<8x512xf32, #tpu.memory_space<vmem>>, vector<8x128xf32>
      tpu.vector_store %arg11[%c0_123, %c384], %170 {strides = array<i32>} : memref<8x512xf32, #tpu.memory_space<vmem>>, vector<8x128xf32>,
    } else {
    }
    %c1_i32_11 = arith.constant 1 : i32
    %20 = arith.cmpi slt, %arg1, %c1_i32_11 : i32
    %21 = arith.extui %20 : i1 to i32
    %c0_i32_12 = arith.constant 0 : i32
    %22 = arith.cmpi ne, %21, %c0_i32_12 : i32
    scf.if %22 {
      %c0_122 = arith.constant 0 : index
      %c0_123 = arith.constant 0 : index
      %c0_124 = arith.constant 0 : index
      %170 = vector.load %arg4[%c0_122, %c0_123, %c0_124] : memref<1x8x256xf32, #tpu.memory_space<vmem>>, vector<1x8x128xf32>
      %171 = vector.shape_cast %170 : vector<1x8x128xf32> to vector<8x128xf32>
      %172 = vector.broadcast %0 : vector<8x1xf32> to vector<8x128xf32>
      %173 = arith.mulf %171, %172 : vector<8x128xf32>
      %174 = vector.broadcast %1 : vector<8x1xf32> to vector<8x128xf32>
      %175 = arith.addf %173, %174 : vector<8x128xf32>
      %cst_125 = arith.constant 0.000000e+00 : f32
      %176 = vector.broadcast %cst_125 : f32 to vector<8x128xf32>
      %177 = arith.maximumf %175, %176 : vector<8x128xf32>
      %c0_126 = arith.constant 0 : index
      %c384 = arith.constant 384 : index
      %178 = vector.load %arg11[%c0_126, %c384] : memref<8x512xf32, #tpu.memory_space<vmem>>, vector<8x128xf32>
      tpu.vector_store %arg11[%c0_126, %c384], %177 {strides = array<i32>} : memref<8x512xf32, #tpu.memory_space<vmem>>, vector<8x128xf32>,
    } else {
    }
    %c0_13 = arith.constant 0 : index
    %c55 = arith.constant 55 : index
    %23 = vector.load %arg11[%c0_13, %c55] : memref<8x512xf32, #tpu.memory_space<vmem>>, vector<8x256xf32>
    %c0_14 = arith.constant 0 : index
    %c0_15 = arith.constant 0 : index
    %24 = vector.load %arg9[%c0_14, %c0_15] : memref<27x256xf32, #tpu.memory_space<vmem>>, vector<1x256xf32>
    %25 = vector.broadcast %24 : vector<1x256xf32> to vector<8x256xf32>
    %26 = arith.mulf %23, %25 : vector<8x256xf32>
    %c0_16 = arith.constant 0 : index
    %c0_17 = arith.constant 0 : index
    %27 = vector.load %arg12[%c0_16, %c0_17] : memref<216x256xf32, #tpu.memory_space<vmem>>, vector<8x256xf32>
    tpu.vector_store %arg12[%c0_16, %c0_17], %26 {strides = array<i32>} : memref<216x256xf32, #tpu.memory_space<vmem>>, vector<8x256xf32>,
    %c0_18 = arith.constant 0 : index
    %c56 = arith.constant 56 : index
    %28 = vector.load %arg11[%c0_18, %c56] : memref<8x512xf32, #tpu.memory_space<vmem>>, vector<8x256xf32>
    %c1 = arith.constant 1 : index
    %c0_19 = arith.constant 0 : index
    %29 = vector.load %arg9[%c1, %c0_19] : memref<27x256xf32, #tpu.memory_space<vmem>>, vector<1x256xf32>
    %30 = vector.broadcast %29 : vector<1x256xf32> to vector<8x256xf32>
    %31 = arith.mulf %28, %30 : vector<8x256xf32>
    %c8 = arith.constant 8 : index
    %c0_20 = arith.constant 0 : index
    %32 = vector.load %arg12[%c8, %c0_20] : memref<216x256xf32, #tpu.memory_space<vmem>>, vector<8x256xf32>
    tpu.vector_store %arg12[%c8, %c0_20], %31 {strides = array<i32>} : memref<216x256xf32, #tpu.memory_space<vmem>>, vector<8x256xf32>,
    %c0_21 = arith.constant 0 : index
    %c57 = arith.constant 57 : index
    %33 = vector.load %arg11[%c0_21, %c57] : memref<8x512xf32, #tpu.memory_space<vmem>>, vector<8x256xf32>
    %c2 = arith.constant 2 : index
    %c0_22 = arith.constant 0 : index
    %34 = vector.load %arg9[%c2, %c0_22] : memref<27x256xf32, #tpu.memory_space<vmem>>, vector<1x256xf32>
    %35 = vector.broadcast %34 : vector<1x256xf32> to vector<8x256xf32>
    %36 = arith.mulf %33, %35 : vector<8x256xf32>
    %c16 = arith.constant 16 : index
    %c0_23 = arith.constant 0 : index
    %37 = vector.load %arg12[%c16, %c0_23] : memref<216x256xf32, #tpu.memory_space<vmem>>, vector<8x256xf32>
    tpu.vector_store %arg12[%c16, %c0_23], %36 {strides = array<i32>} : memref<216x256xf32, #tpu.memory_space<vmem>>, vector<8x256xf32>,
    %c0_24 = arith.constant 0 : index
    %c63 = arith.constant 63 : index
    %38 = vector.load %arg11[%c0_24, %c63] : memref<8x512xf32, #tpu.memory_space<vmem>>, vector<8x256xf32>
    %c3 = arith.constant 3 : index
    %c0_25 = arith.constant 0 : index
    %39 = vector.load %arg9[%c3, %c0_25] : memref<27x256xf32, #tpu.memory_space<vmem>>, vector<1x256xf32>
    %40 = vector.broadcast %39 : vector<1x256xf32> to vector<8x256xf32>
    %41 = arith.mulf %38, %40 : vector<8x256xf32>
    %c24 = arith.constant 24 : index
    %c0_26 = arith.constant 0 : index
    %42 = vector.load %arg12[%c24, %c0_26] : memref<216x256xf32, #tpu.memory_space<vmem>>, vector<8x256xf32>
    tpu.vector_store %arg12[%c24, %c0_26], %41 {strides = array<i32>} : memref<216x256xf32, #tpu.memory_space<vmem>>, vector<8x256xf32>,
    %c0_27 = arith.constant 0 : index
    %c64 = arith.constant 64 : index
    %43 = vector.load %arg11[%c0_27, %c64] : memref<8x512xf32, #tpu.memory_space<vmem>>, vector<8x256xf32>
    %c4 = arith.constant 4 : index
    %c0_28 = arith.constant 0 : index
    %44 = vector.load %arg9[%c4, %c0_28] : memref<27x256xf32, #tpu.memory_space<vmem>>, vector<1x256xf32>
    %45 = vector.broadcast %44 : vector<1x256xf32> to vector<8x256xf32>
    %46 = arith.mulf %43, %45 : vector<8x256xf32>
    %c32 = arith.constant 32 : index
    %c0_29 = arith.constant 0 : index
    %47 = vector.load %arg12[%c32, %c0_29] : memref<216x256xf32, #tpu.memory_space<vmem>>, vector<8x256xf32>
    tpu.vector_store %arg12[%c32, %c0_29], %46 {strides = array<i32>} : memref<216x256xf32, #tpu.memory_space<vmem>>, vector<8x256xf32>,
    %c0_30 = arith.constant 0 : index
    %c65 = arith.constant 65 : index
    %48 = vector.load %arg11[%c0_30, %c65] : memref<8x512xf32, #tpu.memory_space<vmem>>, vector<8x256xf32>
    %c5 = arith.constant 5 : index
    %c0_31 = arith.constant 0 : index
    %49 = vector.load %arg9[%c5, %c0_31] : memref<27x256xf32, #tpu.memory_space<vmem>>, vector<1x256xf32>
    %50 = vector.broadcast %49 : vector<1x256xf32> to vector<8x256xf32>
    %51 = arith.mulf %48, %50 : vector<8x256xf32>
    %c40 = arith.constant 40 : index
    %c0_32 = arith.constant 0 : index
    %52 = vector.load %arg12[%c40, %c0_32] : memref<216x256xf32, #tpu.memory_space<vmem>>, vector<8x256xf32>
    tpu.vector_store %arg12[%c40, %c0_32], %51 {strides = array<i32>} : memref<216x256xf32, #tpu.memory_space<vmem>>, vector<8x256xf32>,
    %c0_33 = arith.constant 0 : index
    %c71 = arith.constant 71 : index
    %53 = vector.load %arg11[%c0_33, %c71] : memref<8x512xf32, #tpu.memory_space<vmem>>, vector<8x256xf32>
    %c6 = arith.constant 6 : index
    %c0_34 = arith.constant 0 : index
    %54 = vector.load %arg9[%c6, %c0_34] : memref<27x256xf32, #tpu.memory_space<vmem>>, vector<1x256xf32>
    %55 = vector.broadcast %54 : vector<1x256xf32> to vector<8x256xf32>
    %56 = arith.mulf %53, %55 : vector<8x256xf32>
    %c48 = arith.constant 48 : index
    %c0_35 = arith.constant 0 : index
    %57 = vector.load %arg12[%c48, %c0_35] : memref<216x256xf32, #tpu.memory_space<vmem>>, vector<8x256xf32>
    tpu.vector_store %arg12[%c48, %c0_35], %56 {strides = array<i32>} : memref<216x256xf32, #tpu.memory_space<vmem>>, vector<8x256xf32>,
    %c0_36 = arith.constant 0 : index
    %c72 = arith.constant 72 : index
    %58 = vector.load %arg11[%c0_36, %c72] : memref<8x512xf32, #tpu.memory_space<vmem>>, vector<8x256xf32>
    %c7 = arith.constant 7 : index
    %c0_37 = arith.constant 0 : index
    %59 = vector.load %arg9[%c7, %c0_37] : memref<27x256xf32, #tpu.memory_space<vmem>>, vector<1x256xf32>
    %60 = vector.broadcast %59 : vector<1x256xf32> to vector<8x256xf32>
    %61 = arith.mulf %58, %60 : vector<8x256xf32>
    %c56_38 = arith.constant 56 : index
    %c0_39 = arith.constant 0 : index
    %62 = vector.load %arg12[%c56_38, %c0_39] : memref<216x256xf32, #tpu.memory_space<vmem>>, vector<8x256xf32>
    tpu.vector_store %arg12[%c56_38, %c0_39], %61 {strides = array<i32>} : memref<216x256xf32, #tpu.memory_space<vmem>>, vector<8x256xf32>,
    %c0_40 = arith.constant 0 : index
    %c73 = arith.constant 73 : index
    %63 = vector.load %arg11[%c0_40, %c73] : memref<8x512xf32, #tpu.memory_space<vmem>>, vector<8x256xf32>
    %c8_41 = arith.constant 8 : index
    %c0_42 = arith.constant 0 : index
    %64 = vector.load %arg9[%c8_41, %c0_42] : memref<27x256xf32, #tpu.memory_space<vmem>>, vector<1x256xf32>
    %65 = vector.broadcast %64 : vector<1x256xf32> to vector<8x256xf32>
    %66 = arith.mulf %63, %65 : vector<8x256xf32>
    %c64_43 = arith.constant 64 : index
    %c0_44 = arith.constant 0 : index
    %67 = vector.load %arg12[%c64_43, %c0_44] : memref<216x256xf32, #tpu.memory_space<vmem>>, vector<8x256xf32>
    tpu.vector_store %arg12[%c64_43, %c0_44], %66 {strides = array<i32>} : memref<216x256xf32, #tpu.memory_space<vmem>>, vector<8x256xf32>,
    %c0_45 = arith.constant 0 : index
    %c119 = arith.constant 119 : index
    %68 = vector.load %arg11[%c0_45, %c119] : memref<8x512xf32, #tpu.memory_space<vmem>>, vector<8x256xf32>
    %c9 = arith.constant 9 : index
    %c0_46 = arith.constant 0 : index
    %69 = vector.load %arg9[%c9, %c0_46] : memref<27x256xf32, #tpu.memory_space<vmem>>, vector<1x256xf32>
    %70 = vector.broadcast %69 : vector<1x256xf32> to vector<8x256xf32>
    %71 = arith.mulf %68, %70 : vector<8x256xf32>
    %c72_47 = arith.constant 72 : index
    %c0_48 = arith.constant 0 : index
    %72 = vector.load %arg12[%c72_47, %c0_48] : memref<216x256xf32, #tpu.memory_space<vmem>>, vector<8x256xf32>
    tpu.vector_store %arg12[%c72_47, %c0_48], %71 {strides = array<i32>} : memref<216x256xf32, #tpu.memory_space<vmem>>, vector<8x256xf32>,
    %c0_49 = arith.constant 0 : index
    %c120 = arith.constant 120 : index
    %73 = vector.load %arg11[%c0_49, %c120] : memref<8x512xf32, #tpu.memory_space<vmem>>, vector<8x256xf32>
    %c10 = arith.constant 10 : index
    %c0_50 = arith.constant 0 : index
    %74 = vector.load %arg9[%c10, %c0_50] : memref<27x256xf32, #tpu.memory_space<vmem>>, vector<1x256xf32>
    %75 = vector.broadcast %74 : vector<1x256xf32> to vector<8x256xf32>
    %76 = arith.mulf %73, %75 : vector<8x256xf32>
    %c80 = arith.constant 80 : index
    %c0_51 = arith.constant 0 : index
    %77 = vector.load %arg12[%c80, %c0_51] : memref<216x256xf32, #tpu.memory_space<vmem>>, vector<8x256xf32>
    tpu.vector_store %arg12[%c80, %c0_51], %76 {strides = array<i32>} : memref<216x256xf32, #tpu.memory_space<vmem>>, vector<8x256xf32>,
    %c0_52 = arith.constant 0 : index
    %c121 = arith.constant 121 : index
    %78 = vector.load %arg11[%c0_52, %c121] : memref<8x512xf32, #tpu.memory_space<vmem>>, vector<8x256xf32>
    %c11 = arith.constant 11 : index
    %c0_53 = arith.constant 0 : index
    %79 = vector.load %arg9[%c11, %c0_53] : memref<27x256xf32, #tpu.memory_space<vmem>>, vector<1x256xf32>
    %80 = vector.broadcast %79 : vector<1x256xf32> to vector<8x256xf32>
    %81 = arith.mulf %78, %80 : vector<8x256xf32>
    %c88 = arith.constant 88 : index
    %c0_54 = arith.constant 0 : index
    %82 = vector.load %arg12[%c88, %c0_54] : memref<216x256xf32, #tpu.memory_space<vmem>>, vector<8x256xf32>
    tpu.vector_store %arg12[%c88, %c0_54], %81 {strides = array<i32>} : memref<216x256xf32, #tpu.memory_space<vmem>>, vector<8x256xf32>,
    %c0_55 = arith.constant 0 : index
    %c127 = arith.constant 127 : index
    %83 = vector.load %arg11[%c0_55, %c127] : memref<8x512xf32, #tpu.memory_space<vmem>>, vector<8x256xf32>
    %c12 = arith.constant 12 : index
    %c0_56 = arith.constant 0 : index
    %84 = vector.load %arg9[%c12, %c0_56] : memref<27x256xf32, #tpu.memory_space<vmem>>, vector<1x256xf32>
    %85 = vector.broadcast %84 : vector<1x256xf32> to vector<8x256xf32>
    %86 = arith.mulf %83, %85 : vector<8x256xf32>
    %c96 = arith.constant 96 : index
    %c0_57 = arith.constant 0 : index
    %87 = vector.load %arg12[%c96, %c0_57] : memref<216x256xf32, #tpu.memory_space<vmem>>, vector<8x256xf32>
    tpu.vector_store %arg12[%c96, %c0_57], %86 {strides = array<i32>} : memref<216x256xf32, #tpu.memory_space<vmem>>, vector<8x256xf32>,
    %c0_58 = arith.constant 0 : index
    %c128_59 = arith.constant 128 : index
    %88 = vector.load %arg11[%c0_58, %c128_59] : memref<8x512xf32, #tpu.memory_space<vmem>>, vector<8x256xf32>
    %c13 = arith.constant 13 : index
    %c0_60 = arith.constant 0 : index
    %89 = vector.load %arg9[%c13, %c0_60] : memref<27x256xf32, #tpu.memory_space<vmem>>, vector<1x256xf32>
    %90 = vector.broadcast %89 : vector<1x256xf32> to vector<8x256xf32>
    %91 = arith.mulf %88, %90 : vector<8x256xf32>
    %c104 = arith.constant 104 : index
    %c0_61 = arith.constant 0 : index
    %92 = vector.load %arg12[%c104, %c0_61] : memref<216x256xf32, #tpu.memory_space<vmem>>, vector<8x256xf32>
    tpu.vector_store %arg12[%c104, %c0_61], %91 {strides = array<i32>} : memref<216x256xf32, #tpu.memory_space<vmem>>, vector<8x256xf32>,
    %c0_62 = arith.constant 0 : index
    %c129 = arith.constant 129 : index
    %93 = vector.load %arg11[%c0_62, %c129] : memref<8x512xf32, #tpu.memory_space<vmem>>, vector<8x256xf32>
    %c14 = arith.constant 14 : index
    %c0_63 = arith.constant 0 : index
    %94 = vector.load %arg9[%c14, %c0_63] : memref<27x256xf32, #tpu.memory_space<vmem>>, vector<1x256xf32>
    %95 = vector.broadcast %94 : vector<1x256xf32> to vector<8x256xf32>
    %96 = arith.mulf %93, %95 : vector<8x256xf32>
    %c112 = arith.constant 112 : index
    %c0_64 = arith.constant 0 : index
    %97 = vector.load %arg12[%c112, %c0_64] : memref<216x256xf32, #tpu.memory_space<vmem>>, vector<8x256xf32>
    tpu.vector_store %arg12[%c112, %c0_64], %96 {strides = array<i32>} : memref<216x256xf32, #tpu.memory_space<vmem>>, vector<8x256xf32>,
    %c0_65 = arith.constant 0 : index
    %c135 = arith.constant 135 : index
    %98 = vector.load %arg11[%c0_65, %c135] : memref<8x512xf32, #tpu.memory_space<vmem>>, vector<8x256xf32>
    %c15 = arith.constant 15 : index
    %c0_66 = arith.constant 0 : index
    %99 = vector.load %arg9[%c15, %c0_66] : memref<27x256xf32, #tpu.memory_space<vmem>>, vector<1x256xf32>
    %100 = vector.broadcast %99 : vector<1x256xf32> to vector<8x256xf32>
    %101 = arith.mulf %98, %100 : vector<8x256xf32>
    %c120_67 = arith.constant 120 : index
    %c0_68 = arith.constant 0 : index
    %102 = vector.load %arg12[%c120_67, %c0_68] : memref<216x256xf32, #tpu.memory_space<vmem>>, vector<8x256xf32>
    tpu.vector_store %arg12[%c120_67, %c0_68], %101 {strides = array<i32>} : memref<216x256xf32, #tpu.memory_space<vmem>>, vector<8x256xf32>,
    %c0_69 = arith.constant 0 : index
    %c136 = arith.constant 136 : index
    %103 = vector.load %arg11[%c0_69, %c136] : memref<8x512xf32, #tpu.memory_space<vmem>>, vector<8x256xf32>
    %c16_70 = arith.constant 16 : index
    %c0_71 = arith.constant 0 : index
    %104 = vector.load %arg9[%c16_70, %c0_71] : memref<27x256xf32, #tpu.memory_space<vmem>>, vector<1x256xf32>
    %105 = vector.broadcast %104 : vector<1x256xf32> to vector<8x256xf32>
    %106 = arith.mulf %103, %105 : vector<8x256xf32>
    %c128_72 = arith.constant 128 : index
    %c0_73 = arith.constant 0 : index
    %107 = vector.load %arg12[%c128_72, %c0_73] : memref<216x256xf32, #tpu.memory_space<vmem>>, vector<8x256xf32>
    tpu.vector_store %arg12[%c128_72, %c0_73], %106 {strides = array<i32>} : memref<216x256xf32, #tpu.memory_space<vmem>>, vector<8x256xf32>,
    %c0_74 = arith.constant 0 : index
    %c137 = arith.constant 137 : index
    %108 = vector.load %arg11[%c0_74, %c137] : memref<8x512xf32, #tpu.memory_space<vmem>>, vector<8x256xf32>
    %c17 = arith.constant 17 : index
    %c0_75 = arith.constant 0 : index
    %109 = vector.load %arg9[%c17, %c0_75] : memref<27x256xf32, #tpu.memory_space<vmem>>, vector<1x256xf32>
    %110 = vector.broadcast %109 : vector<1x256xf32> to vector<8x256xf32>
    %111 = arith.mulf %108, %110 : vector<8x256xf32>
    %c136_76 = arith.constant 136 : index
    %c0_77 = arith.constant 0 : index
    %112 = vector.load %arg12[%c136_76, %c0_77] : memref<216x256xf32, #tpu.memory_space<vmem>>, vector<8x256xf32>
    tpu.vector_store %arg12[%c136_76, %c0_77], %111 {strides = array<i32>} : memref<216x256xf32, #tpu.memory_space<vmem>>, vector<8x256xf32>,
    %c0_78 = arith.constant 0 : index
    %c183 = arith.constant 183 : index
    %113 = vector.load %arg11[%c0_78, %c183] : memref<8x512xf32, #tpu.memory_space<vmem>>, vector<8x256xf32>
    %c18 = arith.constant 18 : index
    %c0_79 = arith.constant 0 : index
    %114 = vector.load %arg9[%c18, %c0_79] : memref<27x256xf32, #tpu.memory_space<vmem>>, vector<1x256xf32>
    %115 = vector.broadcast %114 : vector<1x256xf32> to vector<8x256xf32>
    %116 = arith.mulf %113, %115 : vector<8x256xf32>
    %c144 = arith.constant 144 : index
    %c0_80 = arith.constant 0 : index
    %117 = vector.load %arg12[%c144, %c0_80] : memref<216x256xf32, #tpu.memory_space<vmem>>, vector<8x256xf32>
    tpu.vector_store %arg12[%c144, %c0_80], %116 {strides = array<i32>} : memref<216x256xf32, #tpu.memory_space<vmem>>, vector<8x256xf32>,
    %c0_81 = arith.constant 0 : index
    %c184 = arith.constant 184 : index
    %118 = vector.load %arg11[%c0_81, %c184] : memref<8x512xf32, #tpu.memory_space<vmem>>, vector<8x256xf32>
    %c19 = arith.constant 19 : index
    %c0_82 = arith.constant 0 : index
    %119 = vector.load %arg9[%c19, %c0_82] : memref<27x256xf32, #tpu.memory_space<vmem>>, vector<1x256xf32>
    %120 = vector.broadcast %119 : vector<1x256xf32> to vector<8x256xf32>
    %121 = arith.mulf %118, %120 : vector<8x256xf32>
    %c152 = arith.constant 152 : index
    %c0_83 = arith.constant 0 : index
    %122 = vector.load %arg12[%c152, %c0_83] : memref<216x256xf32, #tpu.memory_space<vmem>>, vector<8x256xf32>
    tpu.vector_store %arg12[%c152, %c0_83], %121 {strides = array<i32>} : memref<216x256xf32, #tpu.memory_space<vmem>>, vector<8x256xf32>,
    %c0_84 = arith.constant 0 : index
    %c185 = arith.constant 185 : index
    %123 = vector.load %arg11[%c0_84, %c185] : memref<8x512xf32, #tpu.memory_space<vmem>>, vector<8x256xf32>
    %c20 = arith.constant 20 : index
    %c0_85 = arith.constant 0 : index
    %124 = vector.load %arg9[%c20, %c0_85] : memref<27x256xf32, #tpu.memory_space<vmem>>, vector<1x256xf32>
    %125 = vector.broadcast %124 : vector<1x256xf32> to vector<8x256xf32>
    %126 = arith.mulf %123, %125 : vector<8x256xf32>
    %c160 = arith.constant 160 : index
    %c0_86 = arith.constant 0 : index
    %127 = vector.load %arg12[%c160, %c0_86] : memref<216x256xf32, #tpu.memory_space<vmem>>, vector<8x256xf32>
    tpu.vector_store %arg12[%c160, %c0_86], %126 {strides = array<i32>} : memref<216x256xf32, #tpu.memory_space<vmem>>, vector<8x256xf32>,
    %c0_87 = arith.constant 0 : index
    %c191 = arith.constant 191 : index
    %128 = vector.load %arg11[%c0_87, %c191] : memref<8x512xf32, #tpu.memory_space<vmem>>, vector<8x256xf32>
    %c21 = arith.constant 21 : index
    %c0_88 = arith.constant 0 : index
    %129 = vector.load %arg9[%c21, %c0_88] : memref<27x256xf32, #tpu.memory_space<vmem>>, vector<1x256xf32>
    %130 = vector.broadcast %129 : vector<1x256xf32> to vector<8x256xf32>
    %131 = arith.mulf %128, %130 : vector<8x256xf32>
    %c168 = arith.constant 168 : index
    %c0_89 = arith.constant 0 : index
    %132 = vector.load %arg12[%c168, %c0_89] : memref<216x256xf32, #tpu.memory_space<vmem>>, vector<8x256xf32>
    tpu.vector_store %arg12[%c168, %c0_89], %131 {strides = array<i32>} : memref<216x256xf32, #tpu.memory_space<vmem>>, vector<8x256xf32>,
    %c0_90 = arith.constant 0 : index
    %c192 = arith.constant 192 : index
    %133 = vector.load %arg11[%c0_90, %c192] : memref<8x512xf32, #tpu.memory_space<vmem>>, vector<8x256xf32>
    %c22 = arith.constant 22 : index
    %c0_91 = arith.constant 0 : index
    %134 = vector.load %arg9[%c22, %c0_91] : memref<27x256xf32, #tpu.memory_space<vmem>>, vector<1x256xf32>
    %135 = vector.broadcast %134 : vector<1x256xf32> to vector<8x256xf32>
    %136 = arith.mulf %133, %135 : vector<8x256xf32>
    %c176 = arith.constant 176 : index
    %c0_92 = arith.constant 0 : index
    %137 = vector.load %arg12[%c176, %c0_92] : memref<216x256xf32, #tpu.memory_space<vmem>>, vector<8x256xf32>
    tpu.vector_store %arg12[%c176, %c0_92], %136 {strides = array<i32>} : memref<216x256xf32, #tpu.memory_space<vmem>>, vector<8x256xf32>,
    %c0_93 = arith.constant 0 : index
    %c193 = arith.constant 193 : index
    %138 = vector.load %arg11[%c0_93, %c193] : memref<8x512xf32, #tpu.memory_space<vmem>>, vector<8x256xf32>
    %c23 = arith.constant 23 : index
    %c0_94 = arith.constant 0 : index
    %139 = vector.load %arg9[%c23, %c0_94] : memref<27x256xf32, #tpu.memory_space<vmem>>, vector<1x256xf32>
    %140 = vector.broadcast %139 : vector<1x256xf32> to vector<8x256xf32>
    %141 = arith.mulf %138, %140 : vector<8x256xf32>
    %c184_95 = arith.constant 184 : index
    %c0_96 = arith.constant 0 : index
    %142 = vector.load %arg12[%c184_95, %c0_96] : memref<216x256xf32, #tpu.memory_space<vmem>>, vector<8x256xf32>
    tpu.vector_store %arg12[%c184_95, %c0_96], %141 {strides = array<i32>} : memref<216x256xf32, #tpu.memory_space<vmem>>, vector<8x256xf32>,
    %c0_97 = arith.constant 0 : index
    %c199 = arith.constant 199 : index
    %143 = vector.load %arg11[%c0_97, %c199] : memref<8x512xf32, #tpu.memory_space<vmem>>, vector<8x256xf32>
    %c24_98 = arith.constant 24 : index
    %c0_99 = arith.constant 0 : index
    %144 = vector.load %arg9[%c24_98, %c0_99] : memref<27x256xf32, #tpu.memory_space<vmem>>, vector<1x256xf32>
    %145 = vector.broadcast %144 : vector<1x256xf32> to vector<8x256xf32>
    %146 = arith.mulf %143, %145 : vector<8x256xf32>
    %c192_100 = arith.constant 192 : index
    %c0_101 = arith.constant 0 : index
    %147 = vector.load %arg12[%c192_100, %c0_101] : memref<216x256xf32, #tpu.memory_space<vmem>>, vector<8x256xf32>
    tpu.vector_store %arg12[%c192_100, %c0_101], %146 {strides = array<i32>} : memref<216x256xf32, #tpu.memory_space<vmem>>, vector<8x256xf32>,
    %c0_102 = arith.constant 0 : index
    %c200 = arith.constant 200 : index
    %148 = vector.load %arg11[%c0_102, %c200] : memref<8x512xf32, #tpu.memory_space<vmem>>, vector<8x256xf32>
    %c25 = arith.constant 25 : index
    %c0_103 = arith.constant 0 : index
    %149 = vector.load %arg9[%c25, %c0_103] : memref<27x256xf32, #tpu.memory_space<vmem>>, vector<1x256xf32>
    %150 = vector.broadcast %149 : vector<1x256xf32> to vector<8x256xf32>
    %151 = arith.mulf %148, %150 : vector<8x256xf32>
    %c200_104 = arith.constant 200 : index
    %c0_105 = arith.constant 0 : index
    %152 = vector.load %arg12[%c200_104, %c0_105] : memref<216x256xf32, #tpu.memory_space<vmem>>, vector<8x256xf32>
    tpu.vector_store %arg12[%c200_104, %c0_105], %151 {strides = array<i32>} : memref<216x256xf32, #tpu.memory_space<vmem>>, vector<8x256xf32>,
    %c0_106 = arith.constant 0 : index
    %c201 = arith.constant 201 : index
    %153 = vector.load %arg11[%c0_106, %c201] : memref<8x512xf32, #tpu.memory_space<vmem>>, vector<8x256xf32>
    %c26 = arith.constant 26 : index
    %c0_107 = arith.constant 0 : index
    %154 = vector.load %arg9[%c26, %c0_107] : memref<27x256xf32, #tpu.memory_space<vmem>>, vector<1x256xf32>
    %155 = vector.broadcast %154 : vector<1x256xf32> to vector<8x256xf32>
    %156 = arith.mulf %153, %155 : vector<8x256xf32>
    %c208 = arith.constant 208 : index
    %c0_108 = arith.constant 0 : index
    %157 = vector.load %arg12[%c208, %c0_108] : memref<216x256xf32, #tpu.memory_space<vmem>>, vector<8x256xf32>
    tpu.vector_store %arg12[%c208, %c0_108], %156 {strides = array<i32>} : memref<216x256xf32, #tpu.memory_space<vmem>>, vector<8x256xf32>,
    %c0_109 = arith.constant 0 : index
    %c0_110 = arith.constant 0 : index
    %158 = vector.load %arg7[%c0_109, %c0_110] : memref<8x216xf32, #tpu.memory_space<vmem>>, vector<8x216xf32>
    %c0_111 = arith.constant 0 : index
    %c0_112 = arith.constant 0 : index
    %159 = vector.load %arg12[%c0_111, %c0_112] : memref<216x256xf32, #tpu.memory_space<vmem>>, vector<216x256xf32>
    %cst_113 = arith.constant dense<0.000000e+00> : vector<8x256xf32>
    %160 = tpu.matmul %158, %159, %cst_113 {dimension_numbers = #tpu.dot_dimension_numbers<[1], [0], [0], [1], [0, 0, 1, 1], [], []>} : vector<8x216xf32>, vector<216x256xf32>, vector<8x256xf32> -> vector<8x256xf32>
    %c0_114 = arith.constant 0 : index
    %c0_115 = arith.constant 0 : index
    %161 = vector.load %arg8[%c0_114, %c0_115] : memref<8x1xf32, #tpu.memory_space<vmem>>, vector<8x1xf32>
    %162 = vector.broadcast %161 : vector<8x1xf32> to vector<8x256xf32>
    %163 = arith.addf %160, %162 : vector<8x256xf32>
    %c0_116 = arith.constant 0 : index
    %c0_117 = arith.constant 0 : index
    %c0_118 = arith.constant 0 : index
    %164 = vector.load %arg3[%c0_116, %c0_117, %c0_118] : memref<1x8x256xf32, #tpu.memory_space<vmem>>, vector<1x8x256xf32>
    %165 = vector.shape_cast %164 : vector<1x8x256xf32> to vector<8x256xf32>
    %166 = arith.addf %163, %165 : vector<8x256xf32>
    %c0_119 = arith.constant 0 : index
    %c0_120 = arith.constant 0 : index
    %c0_121 = arith.constant 0 : index
    %167 = vector.load %arg10[%c0_119, %c0_120, %c0_121] : memref<1x8x256xf32, #tpu.memory_space<vmem>>, vector<1x8x256xf32>
    %168 = vector.shape_cast %167 : vector<1x8x256xf32> to vector<8x256xf32>
    %169 = vector.shape_cast %166 : vector<8x256xf32> to vector<1x8x256xf32>
    tpu.vector_store %arg10[%c0_119, %c0_120, %c0_121], %169 {strides = array<i32>} : memref<1x8x256xf32, #tpu.memory_space<vmem>>, vector<1x8x256xf32>,
    return
  }
  func.func @transform_0(%arg0: i32, %arg1: i32) -> (i32, i32, i32) {
    %c1_i32 = arith.constant 1 : i32
    %0 = arith.subi %arg1, %c1_i32 : i32
    %c0_i32 = arith.constant 0 : i32
    %1 = arith.maxsi %0, %c0_i32 : i32
    %c0_i32_0 = arith.constant 0 : i32
    %c0_i32_1 = arith.constant 0 : i32
    return %arg0, %c0_i32_0, %1 : i32, i32, i32
  }
  func.func @transform_1(%arg0: i32, %arg1: i32) -> (i32, i32, i32) {
    %c0_i32 = arith.constant 0 : i32
    %c0_i32_0 = arith.constant 0 : i32
    return %arg0, %c0_i32, %arg1 : i32, i32, i32
  }
  func.func @transform_2(%arg0: i32, %arg1: i32) -> (i32, i32, i32) {
    %c1_i32 = arith.constant 1 : i32
    %0 = arith.addi %arg1, %c1_i32 : i32
    %c1_i32_0 = arith.constant 1 : i32
    %1 = arith.minsi %0, %c1_i32_0 : i32
    %c0_i32 = arith.constant 0 : i32
    %c0_i32_1 = arith.constant 0 : i32
    return %arg0, %c0_i32, %1 : i32, i32, i32
  }
  func.func @transform_3(%arg0: i32, %arg1: i32) -> (i32, i32) {
    %c0_i32 = arith.constant 0 : i32
    %c0_i32_0 = arith.constant 0 : i32
    %c0_i32_1 = arith.constant 0 : i32
    return %c0_i32, %c0_i32_0 : i32, i32
  }
  func.func @transform_4(%arg0: i32, %arg1: i32) -> (i32, i32) {
    %c0_i32 = arith.constant 0 : i32
    %c0_i32_0 = arith.constant 0 : i32
    %c0_i32_1 = arith.constant 0 : i32
    return %c0_i32, %c0_i32_0 : i32, i32
  }
  func.func @transform_5(%arg0: i32, %arg1: i32) -> (i32, i32) {
    %c0_i32 = arith.constant 0 : i32
    %c0_i32_0 = arith.constant 0 : i32
    %c0_i32_1 = arith.constant 0 : i32
    return %c0_i32, %c0_i32_0 : i32, i32
  }
  func.func @transform_6(%arg0: i32, %arg1: i32) -> (i32, i32) {
    %c0_i32 = arith.constant 0 : i32
    %c0_i32_0 = arith.constant 0 : i32
    %c0_i32_1 = arith.constant 0 : i32
    return %c0_i32, %c0_i32_0 : i32, i32
  }
  func.func @transform_7(%arg0: i32, %arg1: i32) -> (i32, i32) {
    %c0_i32 = arith.constant 0 : i32
    %c0_i32_0 = arith.constant 0 : i32
    return %c0_i32, %arg1 : i32, i32
  }
  func.func @transform_8(%arg0: i32, %arg1: i32) -> (i32, i32, i32) {
    %c0_i32 = arith.constant 0 : i32
    %c0_i32_0 = arith.constant 0 : i32
    return %arg0, %c0_i32, %arg1 : i32, i32, i32
  }
}

</mosaic_0001>

<llo_original>
// kernel: res_module_forward.1
$region0: #{res_module_forward.1}
  #allocation0 [shape = 'u32[]', space=smem, size = 0x4, offset = 0x4, fixed_abs, tag = 'smem constant byte address 0x4 - core index']
  #allocation1 [shape = 'u32[144,128]{1,0:T(1,128)}', space=vmem, size = 0x12000, scoped, tag = 'internal scratch']
  #allocation2 [shape = 'f32[8,512]{1,0:T(8,128)}', space=vmem, size = 0x4000, scoped, tag = 'scratch operand']
  #allocation3 [shape = 'f32[216,256]{1,0:T(8,128)}', space=vmem, size = 0x36000, scoped, tag = 'scratch operand']
  %s0 = inlined_call_operand.vmem [shape: f32[2,8,512], index: 0, kind: input, shape index: {}, may-alias: {0,1,2}]
  %s1 = inlined_call_operand.vmem [shape: f32[2,8,512], index: 1, kind: input, shape index: {}, may-alias: {0,1,2}]
  %s2 = inlined_call_operand.vmem [shape: f32[2,8,512], index: 2, kind: input, shape index: {}, may-alias: {0,1,2}]
  %s3 = inlined_call_operand.vmem [shape: f32[8,1], index: 3, kind: input, shape index: {}]
  %s4 = inlined_call_operand.vmem [shape: f32[8,1], index: 4, kind: input, shape index: {}]
  %s5 = inlined_call_operand.vmem [shape: f32[8,216], index: 5, kind: input, shape index: {}]
  %s6 = inlined_call_operand.vmem [shape: f32[8,1], index: 6, kind: input, shape index: {}]
  %s7 = inlined_call_operand.vmem [shape: f32[27,512], index: 7, kind: input, shape index: {}]
  %s8 = inlined_call_operand.vmem [shape: f32[2,8,512], index: 8, kind: output, shape index: {}]
  %s9 = sld [smem:[#allocation0]]
  $region104: #{res_module_forward.1} parent=0
    _
  %s11 = ssub.s32 1, %s9
  %s12 = scalar_select 0, %s11, %s9
  $region1: #{res_module_forward.1} parent=0
    #allocation4 [shape = 'u8[65536]{0}', space=vmem, size = 0x10000, scoped, tag = 'input window, operand 7']
    loop: start=0, step=1, limit=6
    $region2: #{res_module_forward.1} parent=1 // loop_pre_header
      _
    $region3: #{res_module_forward.1} parent=1 // loop_header
      %s14 = sphi 0, %s18
      %p15 = scmp.ge.s32.totalorder %s14, 6
      %s21 = sphi 0, %s33
      %s22 = sphi 0, %s29
      %s23 = sphi 0, %s21
      %s24 = sphi 0, %s22
      %s25 = sphi 0, %s23
      %s26 = sphi 0, %s24
      %s44 = sphi 0, %s46
      %s47 = sphi 0, %s44
      %s48 = sphi 0, %s47
      %s64 = sphi 0, %s48
      %s72 = sphi 0, %s74
      %s75 = sphi 0, %s72
      %s76 = sphi 0, %s75
      %s92 = sphi 0, %s76
      %s106 = sphi 0, %s108
      %s109 = sphi 0, %s106
      %s110 = sphi 0, %s109
      %s126 = sphi 0, %s110
      %s130 = sphi 0, %s130
      %s132 = sphi 0, %s130
      %s133 = sphi 0, %s132
      %s147 = sphi 0, %s133
      %s151 = sphi 0, %s151
      %s153 = sphi 0, %s151
      %s154 = sphi 0, %s153
      %s168 = sphi 0, %s154
      %s172 = sphi 0, %s172
      %s174 = sphi 0, %s172
      %s175 = sphi 0, %s174
      %s189 = sphi 0, %s175
      %s193 = sphi 0, %s193
      %s195 = sphi 0, %s193
      %s196 = sphi 0, %s195
      %s210 = sphi 0, %s196
      %s216 = sphi 0, %s218
      %s219 = sphi 0, %s216
      %s220 = sphi 0, %s219
      %s236 = sphi 0, %s220
      %s244 = sphi 0, %s246
      %s247 = sphi 0, %s244
      %s248 = sphi 0, %s247
      %s264 = sphi 0, %s248
    $region4: #{res_module_forward.1} parent=1 // loop_header_branch
      %17 = sbr.rel (%p15) target = $region8
    $region5: #{res_module_forward.1} parent=1 // loop_body
      %s19 = ssub.s32 %s14, 1
      %s20 = ssub.s32 %s14, 2
      %s27 = sadd.s32 1, %s22
      %p28 = scmp.ge.s32.totalorder %s27, 2
      %s29 = scalar_select %p28, 0, %s27
      %s30 = sadd.s32 1, %s21
      %s31 = scalar_select %p28, %s30, %s21
      %p32 = scmp.ge.s32.totalorder %s31, 2
      %s33 = scalar_select %p32, 0, %s31
      %s34 = ssub.s32 %s22, 1
      %p35 = scmp.gt.s32.totalorder %s34, 0
      %s36 = scalar_select %p35, %s34, 0
      %s37 = ssub.s32 %s29, 1
      %p38 = scmp.gt.s32.totalorder %s37, 0
      %s39 = scalar_select %p38, %s37, 0
      %s40 = ssub.s32 %s21, %s33
      %s41 = ssub.s32 %s36, %s39
      %s42 = sor.u32 %s40, %s41
      %p43 = scmp.eq.s32.totalorder %s42, 0
      %s45 = sadd.s32 %s44, 1
      %s46 = scalar_select %p43, %s44, %s45
      %p49 = pneg %p43
      %p50 = scmp.eq.s32.totalorder %s14, 3
      %p51 = por %p49, %p50
      %p52 = scmp.ne.s32.totalorder %s44, %s47
      %p53 = scmp.eq.s32.totalorder %s14, 0
      %p54 = por %p52, %p53
      %p55 = scmp.ne.s32.totalorder %s44, %s47
      %p56 = scmp.eq.s32.totalorder %s19, 3
      %p57 = por %p55, %p56
      %p58 = scmp.ne.s32.totalorder %s47, %s48
      %p59 = scmp.eq.s32.totalorder %s19, 0
      %p60 = por %p58, %p59
      %p61 = scmp.ne.s32.totalorder %s47, %s48
      %p62 = scmp.eq.s32.totalorder %s20, 3
      %p63 = por %p61, %p62
      %p65 = scmp.ne.s32.totalorder %s48, %s64
      %p66 = scmp.eq.s32.totalorder %s20, 0
      %p67 = por %p65, %p66
      %s68 = ssub.s32 %s21, %s33
      %s69 = ssub.s32 %s22, %s29
      %s70 = sor.u32 %s68, %s69
      %p71 = scmp.eq.s32.totalorder %s70, 0
      %s73 = sadd.s32 %s72, 1
      %s74 = scalar_select %p71, %s72, %s73
      %p77 = pneg %p71
      %p78 = scmp.eq.s32.totalorder %s14, 3
      %p79 = por %p77, %p78
      %p80 = scmp.ne.s32.totalorder %s72, %s75
      %p81 = scmp.eq.s32.totalorder %s14, 0
      %p82 = por %p80, %p81
      %p83 = scmp.ne.s32.totalorder %s72, %s75
      %p84 = scmp.eq.s32.totalorder %s19, 3
      %p85 = por %p83, %p84
      %p86 = scmp.ne.s32.totalorder %s75, %s76
      %p87 = scmp.eq.s32.totalorder %s19, 0
      %p88 = por %p86, %p87
      %p89 = scmp.ne.s32.totalorder %s75, %s76
      %p90 = scmp.eq.s32.totalorder %s20, 3
      %p91 = por %p89, %p90
      %p93 = scmp.ne.s32.totalorder %s76, %s92
      %p94 = scmp.eq.s32.totalorder %s20, 0
      %p95 = por %p93, %p94
      %s96 = sadd.s32 %s22, 1
      %p97 = scmp.lt.s32.totalorder %s96, 1
      %s98 = scalar_select %p97, %s96, 1
      %s99 = sadd.s32 %s29, 1
      %p100 = scmp.lt.s32.totalorder %s99, 1
      %s101 = scalar_select %p100, %s99, 1
      %s102 = ssub.s32 %s21, %s33
      %s103 = ssub.s32 %s98, %s101
      %s104 = sor.u32 %s102, %s103
      %p105 = scmp.eq.s32.totalorder %s104, 0
      %s107 = sadd.s32 %s106, 1
      %s108 = scalar_select %p105, %s106, %s107
      %p111 = pneg %p105
      %p112 = scmp.eq.s32.totalorder %s14, 3
      %p113 = por %p111, %p112
      %p114 = scmp.ne.s32.totalorder %s106, %s109
      %p115 = scmp.eq.s32.totalorder %s14, 0
      %p116 = por %p114, %p115
      %p117 = scmp.ne.s32.totalorder %s106, %s109
      %p118 = scmp.eq.s32.totalorder %s19, 3
      %p119 = por %p117, %p118
      %p120 = scmp.ne.s32.totalorder %s109, %s110
      %p121 = scmp.eq.s32.totalorder %s19, 0
      %p122 = por %p120, %p121
      %p123 = scmp.ne.s32.totalorder %s109, %s110
      %p124 = scmp.eq.s32.totalorder %s20, 3
      %p125 = por %p123, %p124
      %p127 = scmp.ne.s32.totalorder %s110, %s126
      %p128 = scmp.eq.s32.totalorder %s20, 0
      %p129 = por %p127, %p128
      %s131 = sadd.s32 %s130, 1
      %p134 = scmp.eq.s32.totalorder %s14, 3
      %p135 = scmp.ne.s32.totalorder %s130, %s132
      %p136 = scmp.eq.s32.totalorder %s14, 0
      %p137 = por %p135, %p136
      %p138 = scmp.ne.s32.totalorder %s130, %s132
      %p139 = scmp.eq.s32.totalorder %s19, 3
      %p140 = por %p138, %p139
      %p141 = scmp.ne.s32.totalorder %s132, %s133
      %p142 = scmp.eq.s32.totalorder %s19, 0
      %p143 = por %p141, %p142
      %p144 = scmp.ne.s32.totalorder %s132, %s133
      %p145 = scmp.eq.s32.totalorder %s20, 3
      %p146 = por %p144, %p145
      %p148 = scmp.ne.s32.totalorder %s133, %s147
      %p149 = scmp.eq.s32.totalorder %s20, 0
      %p150 = por %p148, %p149
      %s152 = sadd.s32 %s151, 1
      %p155 = scmp.eq.s32.totalorder %s14, 3
      %p156 = scmp.ne.s32.totalorder %s151, %s153
      %p157 = scmp.eq.s32.totalorder %s14, 0
      %p158 = por %p156, %p157
      %p159 = scmp.ne.s32.totalorder %s151, %s153
      %p160 = scmp.eq.s32.totalorder %s19, 3
      %p161 = por %p159, %p160
      %p162 = scmp.ne.s32.totalorder %s153, %s154
      %p163 = scmp.eq.s32.totalorder %s19, 0
      %p164 = por %p162, %p163
      %p165 = scmp.ne.s32.totalorder %s153, %s154
      %p166 = scmp.eq.s32.totalorder %s20, 3
      %p167 = por %p165, %p166
      %p169 = scmp.ne.s32.totalorder %s154, %s168
      %p170 = scmp.eq.s32.totalorder %s20, 0
      %p171 = por %p169, %p170
      %s173 = sadd.s32 %s172, 1
      %p176 = scmp.eq.s32.totalorder %s14, 3
      %p177 = scmp.ne.s32.totalorder %s172, %s174
      %p178 = scmp.eq.s32.totalorder %s14, 0
      %p179 = por %p177, %p178
      %p180 = scmp.ne.s32.totalorder %s172, %s174
      %p181 = scmp.eq.s32.totalorder %s19, 3
      %p182 = por %p180, %p181
      %p183 = scmp.ne.s32.totalorder %s174, %s175
      %p184 = scmp.eq.s32.totalorder %s19, 0
      %p185 = por %p183, %p184
      %p186 = scmp.ne.s32.totalorder %s174, %s175
      %p187 = scmp.eq.s32.totalorder %s20, 3
      %p188 = por %p186, %p187
      %p190 = scmp.ne.s32.totalorder %s175, %s189
      %p191 = scmp.eq.s32.totalorder %s20, 0
      %p192 = por %p190, %p191
      %s194 = sadd.s32 %s193, 1
      %p197 = scmp.eq.s32.totalorder %s14, 3
      %p198 = scmp.ne.s32.totalorder %s193, %s195
      %p199 = scmp.eq.s32.totalorder %s14, 0
      %p200 = por %p198, %p199
      %p201 = scmp.ne.s32.totalorder %s193, %s195
      %p202 = scmp.eq.s32.totalorder %s19, 3
      %p203 = por %p201, %p202
      %p204 = scmp.ne.s32.totalorder %s195, %s196
      %p205 = scmp.eq.s32.totalorder %s19, 0
      %p206 = por %p204, %p205
      %p207 = scmp.ne.s32.totalorder %s195, %s196
      %p208 = scmp.eq.s32.totalorder %s20, 3
      %p209 = por %p207, %p208
      %p211 = scmp.ne.s32.totalorder %s196, %s210
      %p212 = scmp.eq.s32.totalorder %s20, 0
      %p213 = por %p211, %p212
      %s214 = ssub.s32 %s22, %s29
      %p215 = scmp.eq.s32.totalorder %s214, 0
      %s217 = sadd.s32 %s216, 1
      %s218 = scalar_select %p215, %s216, %s217
      %p221 = pneg %p215
      %p222 = scmp.eq.s32.totalorder %s14, 3
      %p223 = por %p221, %p222
      %p224 = scmp.ne.s32.totalorder %s216, %s219
      %p225 = scmp.eq.s32.totalorder %s14, 0
      %p226 = por %p224, %p225
      %p227 = scmp.ne.s32.totalorder %s216, %s219
      %p228 = scmp.eq.s32.totalorder %s19, 3
      %p229 = por %p227, %p228
      %p230 = scmp.ne.s32.totalorder %s219, %s220
      %p231 = scmp.eq.s32.totalorder %s19, 0
      %p232 = por %p230, %p231
      %p233 = scmp.ne.s32.totalorder %s219, %s220
      %p234 = scmp.eq.s32.totalorder %s20, 3
      %p235 = por %p233, %p234
      %p237 = scmp.ne.s32.totalorder %s220, %s236
      %p238 = scmp.eq.s32.totalorder %s20, 0
      %p239 = por %p237, %p238
      %s240 = ssub.s32 %s21, %s33
      %s241 = ssub.s32 %s22, %s29
      %s242 = sor.u32 %s240, %s241
      %p243 = scmp.eq.s32.totalorder %s242, 0
      %s245 = sadd.s32 %s244, 1
      %s246 = scalar_select %p243, %s244, %s245
      %p249 = pneg %p243
      %p250 = scmp.eq.s32.totalorder %s14, 3
      %p251 = por %p249, %p250
      %p252 = scmp.ne.s32.totalorder %s244, %s247
      %p253 = scmp.eq.s32.totalorder %s14, 0
      %p254 = por %p252, %p253
      %p255 = scmp.ne.s32.totalorder %s244, %s247
      %p256 = scmp.eq.s32.totalorder %s19, 3
      %p257 = por %p255, %p256
      %p258 = scmp.ne.s32.totalorder %s247, %s248
      %p259 = scmp.eq.s32.totalorder %s19, 0
      %p260 = por %p258, %p259
      %p261 = scmp.ne.s32.totalorder %s247, %s248
      %p262 = scmp.eq.s32.totalorder %s20, 3
      %p263 = por %p261, %p262
      %p265 = scmp.ne.s32.totalorder %s248, %s264
      %p266 = scmp.eq.s32.totalorder %s20, 0
      %p267 = por %p265, %p266
      %p268 = scmp.le.s32.totalorder 1, %s14
      %p269 = scmp.lt.s32.totalorder %s14, 5
      %p270 = pnand %p268, %p269
      %p271 = pneg %p270
      // Predicated region
      $region9: #{res_module_forward.1} parent=5 // pred_check
        _
      $region10: #{res_module_forward.1} parent=5 // pred_check_branch
        %273 = sbr.rel (%p270) target = $region12
      $region11: #{res_module_forward.1} parent=5 // pred_region
        %s274 = ssub.s32 %s14, 1
        // Predicated region
        $region13: #{res_module_forward.1} parent=11 // pred_check
          %p275 = pneg %p143
        $region14: #{res_module_forward.1} parent=11 // pred_check_branch
          %277 = sbr.rel (%p275) target = $region16
        $region15: #{res_module_forward.1} parent=11 // pred_region
          _
        $region16: #{res_module_forward.1} parent=11 // pred_fallthru
          _
        // Predicated region
        $region17: #{res_module_forward.1} parent=11 // pred_check
          %p278 = pneg %p164
        $region18: #{res_module_forward.1} parent=11 // pred_check_branch
          %280 = sbr.rel (%p278) target = $region20
        $region19: #{res_module_forward.1} parent=11 // pred_region
          _
        $region20: #{res_module_forward.1} parent=11 // pred_fallthru
          _
        // Predicated region
        $region21: #{res_module_forward.1} parent=11 // pred_check
          %p281 = pneg %p185
        $region22: #{res_module_forward.1} parent=11 // pred_check_branch
          %283 = sbr.rel (%p281) target = $region24
        $region23: #{res_module_forward.1} parent=11 // pred_region
          _
        $region24: #{res_module_forward.1} parent=11 // pred_fallthru
          _
        // Predicated region
        $region25: #{res_module_forward.1} parent=11 // pred_check
          %p284 = pneg %p206
        $region26: #{res_module_forward.1} parent=11 // pred_check_branch
          %286 = sbr.rel (%p284) target = $region28
        $region27: #{res_module_forward.1} parent=11 // pred_region
          _
        $region28: #{res_module_forward.1} parent=11 // pred_fallthru
          _
      $region12: #{res_module_forward.1} parent=5 // pred_fallthru
        _
      %p287 = scmp.lt.s32.totalorder %s14, 4
      // Predicated region
      $region29: #{res_module_forward.1} parent=5 // pred_check
        %p288 = pneg %p287
      $region30: #{res_module_forward.1} parent=5 // pred_check_branch
        %290 = sbr.rel (%p288) target = $region32
      $region31: #{res_module_forward.1} parent=5 // pred_region
        // Predicated region
        $region33: #{res_module_forward.1} parent=31 // pred_check
          %p291 = pneg %p54
        $region34: #{res_module_forward.1} parent=31 // pred_check_branch
          %293 = sbr.rel (%p291) target = $region36
        $region35: #{res_module_forward.1} parent=31 // pred_region
          %s294 = ssub.s32 %s22, 1
          %p295 = scmp.gt.s32.totalorder %s294, 0
          %s296 = scalar_select %p295, %s294, 0
          %s297 = smul.u32 2, %s296
          %p298 = scmp.lt.s32.totalorder %s21, 1
          %s299 = scalar_select %p298, %s21, 1
          %p300 = scmp.lt.s32.totalorder %s297, 3
          %s301 = scalar_select %p300, %s297, 3
          %s302 = smul.addr %s299, 4
          %s303 = sadd.s32 %s301, %s302
          %s304 = smul.addr %s303, 8
          %s305 = scalar_lea.vmem %s0, %s304
          %s306 = ssub.s32 %s22, 1
          %p307 = scmp.gt.s32.totalorder %s306, 0
          %s308 = scalar_select %p307, %s306, 0
          %s309 = smul.u32 2, %s308
        $region36: #{res_module_forward.1} parent=31 // pred_fallthru
          _
        // Predicated region
        $region37: #{res_module_forward.1} parent=31 // pred_check
          %p310 = pneg %p82
        $region38: #{res_module_forward.1} parent=31 // pred_check_branch
          %312 = sbr.rel (%p310) target = $region40
        $region39: #{res_module_forward.1} parent=31 // pred_region
          %s313 = smul.u32 2, %s22
          %p314 = scmp.lt.s32.totalorder %s21, 1
          %s315 = scalar_select %p314, %s21, 1
          %p316 = scmp.lt.s32.totalorder %s313, 3
          %s317 = scalar_select %p316, %s313, 3
          %s318 = smul.addr %s315, 4
          %s319 = sadd.s32 %s317, %s318
          %s320 = smul.addr %s319, 8
          %s321 = scalar_lea.vmem %s1, %s320
          %s322 = smul.u32 2, %s22
        $region40: #{res_module_forward.1} parent=31 // pred_fallthru
          _
        // Predicated region
        $region41: #{res_module_forward.1} parent=31 // pred_check
          %p323 = pneg %p116
        $region42: #{res_module_forward.1} parent=31 // pred_check_branch
          %325 = sbr.rel (%p323) target = $region44
        $region43: #{res_module_forward.1} parent=31 // pred_region
          %s326 = sadd.s32 %s22, 1
          %p327 = scmp.lt.s32.totalorder %s326, 1
          %s328 = scalar_select %p327, %s326, 1
          %s329 = smul.u32 2, %s328
          %p330 = scmp.lt.s32.totalorder %s21, 1
          %s331 = scalar_select %p330, %s21, 1
          %p332 = scmp.lt.s32.totalorder %s329, 3
          %s333 = scalar_select %p332, %s329, 3
          %s334 = smul.addr %s331, 4
          %s335 = sadd.s32 %s333, %s334
          %s336 = smul.addr %s335, 8
          %s337 = scalar_lea.vmem %s2, %s336
          %s338 = sadd.s32 %s22, 1
          %p339 = scmp.lt.s32.totalorder %s338, 1
          %s340 = scalar_select %p339, %s338, 1
          %s341 = smul.u32 2, %s340
        $region44: #{res_module_forward.1} parent=31 // pred_fallthru
          _
        // Predicated region
        $region45: #{res_module_forward.1} parent=31 // pred_check
          %p342 = pneg %p226
        $region46: #{res_module_forward.1} parent=31 // pred_check_branch
          %344 = sbr.rel (%p342) target = $region48
        $region47: #{res_module_forward.1} parent=31 // pred_region
          %s345 = sand.u32 %s216, 1
          %s346 = sand.u32 %s216, 1
          %s347 = smul.addr %s346, 64
          %s348 = scalar_lea.vmem [#allocation4], %s347
          %s349 = smul.u32 2, %s22
          %s350 = smul.addr %s349, 8
          %s351 = scalar_lea.vmem %s7, %s350
          // Predicated region
          $region49: #{res_module_forward.1} parent=47 // pred_check
            _
          $region50: #{res_module_forward.1} parent=47 // pred_check_branch
            %353 = sbr.rel (0) target = $region52
          $region51: #{res_module_forward.1} parent=47 // pred_region
            // Predicated region
            $region53: #{res_module_forward.1} parent=51 // pred_check
              _
            $region54: #{res_module_forward.1} parent=51 // pred_check_branch
              %355 = sbr.rel (0) target = $region56
            $region55: #{res_module_forward.1} parent=51 // pred_region
              loop: start=0, step=1, limit=1
              $region57: #{res_module_forward.1} parent=55 // loop_pre_header
                _
              $region58: #{res_module_forward.1} parent=55 // loop_header
                %s357 = sphi 0, %s361
                %p358 = scmp.ge.s32.totalorder %s357, 1
                %s362 = sphi %s351, %s351
                %s363 = sphi %s348, %s348
              $region59: #{res_module_forward.1} parent=55 // loop_header_branch
                %360 = sbr.rel (%p358) target = $region63
              $region60: #{res_module_forward.1} parent=55 // loop_body
                %v364 = vld [vmem:[%s362] sm:$0xff]
                %365 = vst [vmem:[%s363] sm:$0xff] %v364
                %v366 = vld [vmem:[%s362 + $0x8] sm:$0xff]
                %367 = vst [vmem:[%s363 + $0x8] sm:$0xff] %v366
                %v368 = vld [vmem:[%s362 + $0x20] sm:$0xff]
                %369 = vst [vmem:[%s363 + $0x10] sm:$0xff] %v368
                %v370 = vld [vmem:[%s362 + $0x28] sm:$0xff]
                %371 = vst [vmem:[%s363 + $0x18] sm:$0xff] %v370
                %v372 = vld [vmem:[%s362 + $0x40] sm:$0xff]
                %373 = vst [vmem:[%s363 + $0x20] sm:$0xff] %v372
                %v374 = vld [vmem:[%s362 + $0x48] sm:$0xff]
                %375 = vst [vmem:[%s363 + $0x28] sm:$0xff] %v374
                %v376 = vld [vmem:[%s362 + $0x60] sm:$0xff]
                %377 = vst [vmem:[%s363 + $0x30] sm:$0xff] %v376
                %v378 = vld [vmem:[%s362 + $0x68] sm:$0xff]
                %379 = vst [vmem:[%s363 + $0x38] sm:$0xff] %v378
              $region61: #{res_module_forward.1} parent=55 // loop_footer
                %s361 = sadd.s32 1, %s357
              $region62: #{res_module_forward.1} parent=55 // loop_footer_branch
                %356 = sbr.rel target = $region58
              $region63: #{res_module_forward.1} parent=55 // loop_exit
                _
            $region56: #{res_module_forward.1} parent=51 // pred_fallthru
              _
            // Predicated region
            $region64: #{res_module_forward.1} parent=51 // pred_check
              _
            $region65: #{res_module_forward.1} parent=51 // pred_check_branch
              %381 = sbr.rel target = $region67
            $region66: #{res_module_forward.1} parent=51 // pred_region
              _
            $region67: #{res_module_forward.1} parent=51 // pred_fallthru
              _
          $region52: #{res_module_forward.1} parent=47 // pred_fallthru
            _
          %382 = vnop
        $region48: #{res_module_forward.1} parent=31 // pred_fallthru
          _
      $region32: #{res_module_forward.1} parent=5 // pred_fallthru
        _
      %p383 = scmp.le.s32.totalorder 1, %s14
      %p384 = scmp.lt.s32.totalorder %s14, 5
      %p385 = pnand %p383, %p384
      %p386 = pneg %p385
      // Predicated region
      $region68: #{res_module_forward.1} parent=5 // pred_check
        _
      $region69: #{res_module_forward.1} parent=5 // pred_check_branch
        %388 = sbr.rel (%p385) target = $region71
      $region70: #{res_module_forward.1} parent=5 // pred_region
        %s389 = ssub.s32 %s14, 1
        %s390 = sand.u32 %s219, 1
        %s391 = sand.u32 %s219, 1
        %s392 = smul.addr %s391, 64
        %s393 = scalar_lea.vmem [#allocation4], %s392
        // Predicated region
        $region72: #{res_module_forward.1} parent=70 // pred_check
          %p394 = pneg %p232
        $region73: #{res_module_forward.1} parent=70 // pred_check_branch
          %396 = sbr.rel (%p394) target = $region75
        $region74: #{res_module_forward.1} parent=70 // pred_region
          _
        $region75: #{res_module_forward.1} parent=70 // pred_fallthru
          _
        %s397 = ssub.s32 %s24, 1
        %p398 = scmp.gt.s32.totalorder %s397, 0
        %s399 = scalar_select %p398, %s397, 0
        %s400 = smul.u32 2, %s399
        %p401 = scmp.lt.s32.totalorder %s23, 1
        %s402 = scalar_select %p401, %s23, 1
        %p403 = scmp.lt.s32.totalorder %s400, 3
        %s404 = scalar_select %p403, %s400, 3
        %s405 = smul.addr %s402, 4
        %s406 = sadd.s32 %s404, %s405
        %s407 = smul.addr %s406, 8
        %s408 = scalar_lea.vmem %s0, %s407
        %p409 = pneg %p60
        %p410 = pneg %p57
        %s411 = smul.u32 2, %s24
        %p412 = scmp.lt.s32.totalorder %s23, 1
        %s413 = scalar_select %p412, %s23, 1
        %p414 = scmp.lt.s32.totalorder %s411, 3
        %s415 = scalar_select %p414, %s411, 3
        %s416 = smul.addr %s413, 4
        %s417 = sadd.s32 %s415, %s416
        %s418 = smul.addr %s417, 8
        %s419 = scalar_lea.vmem %s1, %s418
        %p420 = pneg %p88
        %p421 = pneg %p85
        %s422 = sadd.s32 %s24, 1
        %p423 = scmp.lt.s32.totalorder %s422, 1
        %s424 = scalar_select %p423, %s422, 1
        %s425 = smul.u32 2, %s424
        %p426 = scmp.lt.s32.totalorder %s23, 1
        %s427 = scalar_select %p426, %s23, 1
        %p428 = scmp.lt.s32.totalorder %s425, 3
        %s429 = scalar_select %p428, %s425, 3
        %s430 = smul.addr %s427, 4
        %s431 = sadd.s32 %s429, %s430
        %s432 = smul.addr %s431, 8
        %s433 = scalar_lea.vmem %s2, %s432
        %p434 = pneg %p122
        %p435 = pneg %p119
        %p436 = pneg %p143
        %p437 = pneg %p140
        %p438 = pneg %p164
        %p439 = pneg %p161
        %p440 = pneg %p185
        %p441 = pneg %p182
        %p442 = pneg %p206
        %p443 = pneg %p203
        %s444 = sand.u32 %s219, 1
        %s445 = sand.u32 %s219, 1
        %s446 = smul.addr %s445, 64
        %s447 = scalar_lea.vmem [#allocation4], %s446
        %p448 = pneg %p232
        %p449 = pneg %p229
        %p450 = pneg %p260
        %p451 = pneg %p257
        %s452 = smul.u32 2, %s24
        %p453 = scmp.lt.s32.totalorder %s23, 1
        %s454 = scalar_select %p453, %s23, 1
        %p455 = scmp.lt.s32.totalorder %s452, 3
        %s456 = scalar_select %p455, %s452, 3
        %s457 = smul.addr %s454, 4
        %s458 = sadd.s32 %s456, %s457
        %s459 = smul.addr %s458, 8
        %s460 = scalar_lea.vmem %s8, %s459
        %s461 = ssub.s32 %s24, 1
        %p462 = scmp.gt.s32.totalorder %s461, 0
        %s463 = scalar_select %p462, %s461, 0
        %s464 = smul.u32 2, %s463
        %p465 = scmp.lt.s32.totalorder %s23, 1
        %s466 = scalar_select %p465, %s23, 1
        %p467 = scmp.lt.s32.totalorder %s464, 3
        %s468 = scalar_select %p467, %s464, 3
        %s469 = smul.addr %s466, 4
        %s470 = sadd.s32 %s468, %s469
        %s471 = smul.addr %s470, 8
        %s472 = scalar_lea.vmem %s0, %s471
        %s473 = ssub.s32 %s24, 1
        %p474 = scmp.gt.s32.totalorder %s473, 0
        %s475 = scalar_select %p474, %s473, 0
        %s476 = smul.u32 2, %s475
        %s477 = smul.u32 2, %s24
        %p478 = scmp.lt.s32.totalorder %s23, 1
        %s479 = scalar_select %p478, %s23, 1
        %p480 = scmp.lt.s32.totalorder %s477, 3
        %s481 = scalar_select %p480, %s477, 3
        %s482 = smul.addr %s479, 4
        %s483 = sadd.s32 %s481, %s482
        %s484 = smul.addr %s483, 8
        %s485 = scalar_lea.vmem %s1, %s484
        %s486 = smul.u32 2, %s24
        %s487 = sadd.s32 %s24, 1
        %p488 = scmp.lt.s32.totalorder %s487, 1
        %s489 = scalar_select %p488, %s487, 1
        %s490 = smul.u32 2, %s489
        %p491 = scmp.lt.s32.totalorder %s23, 1
        %s492 = scalar_select %p491, %s23, 1
        %p493 = scmp.lt.s32.totalorder %s490, 3
        %s494 = scalar_select %p493, %s490, 3
        %s495 = smul.addr %s492, 4
        %s496 = sadd.s32 %s494, %s495
        %s497 = smul.addr %s496, 8
        %s498 = scalar_lea.vmem %s2, %s497
        %s499 = sadd.s32 %s24, 1
        %p500 = scmp.lt.s32.totalorder %s499, 1
        %s501 = scalar_select %p500, %s499, 1
        %s502 = smul.u32 2, %s501
        %s503 = smul.u32 2, %s24
        %s504 = smul.u32 2, %s24
        %p505 = scmp.lt.s32.totalorder %s23, 1
        %s506 = scalar_select %p505, %s23, 1
        %p507 = scmp.lt.s32.totalorder %s504, 3
        %s508 = scalar_select %p507, %s504, 3
        %s509 = smul.addr %s506, 4
        %s510 = sadd.s32 %s508, %s509
        %s511 = smul.addr %s510, 8
        %s512 = scalar_lea.vmem %s8, %s511
        %s513 = smul.u32 2, %s24
        %v514 = vld [vmem:[%s3] sm:$0xff]
        %v515 = vld [vmem:[%s4] sm:$0xff]
        %v516 = vld [vmem:[%s485] sm:$0xff]
        %v517 = vld [vmem:[%s485 + $0x8] sm:$0xff]
        %519 = vset.pattern.permute.xlu0 0
        %520 = vperm.xlu0 %519, %v514
        %v521 = vpop.permute.xlu0 %520
        %v523 = vmul.f32 %v516, %v521
        %v524 = vmul.f32 %v517, %v521
        %526 = vset.pattern.permute.xlu0 0
        %527 = vperm.xlu0 %526, %v515
        %v528 = vpop.permute.xlu0 %527
        %v530 = vadd.f32 %v523, %v528
        %v531 = vadd.f32 %v524, %v528
        %v532 = vmax.f32 %v530, 0.0
        %v533 = vmax.f32 %v531, 0.0
        %534 = vst [vmem:[#allocation2 + $0x8] sm:$0xff] %v532
        %535 = vst [vmem:[#allocation2 + $0x10] sm:$0xff] %v533
        %p536 = scmp.eq.s32.totalorder %s24, 0
        // Predicated region
        $region76: #{res_module_forward.1} parent=70 // pred_check
          %p537 = pneg %p536
        $region77: #{res_module_forward.1} parent=70 // pred_check_branch
          %539 = sbr.rel (%p537) target = $region79
        $region78: #{res_module_forward.1} parent=70 // pred_region
          %540 = vst [vmem:[#allocation2] sm:$0xff] 0.0
        $region79: #{res_module_forward.1} parent=70 // pred_fallthru
          _
        %p541 = scmp.gt.s32.totalorder %s24, 0
        // Predicated region
        $region80: #{res_module_forward.1} parent=70 // pred_check
          %p542 = pneg %p541
        $region81: #{res_module_forward.1} parent=70 // pred_check_branch
          %544 = sbr.rel (%p542) target = $region83
        $region82: #{res_module_forward.1} parent=70 // pred_region
          %v545 = vld [vmem:[%s472 + $0x8] sm:$0xff]
          %v546 = vmul.f32 %v545, %v521
          %v547 = vadd.f32 %v546, %v528
          %v548 = vmax.f32 %v547, 0.0
          %549 = vst [vmem:[#allocation2] sm:$0xff] %v548
        $region83: #{res_module_forward.1} parent=70 // pred_fallthru
          _
        %p550 = scmp.eq.s32.totalorder %s24, 1
        // Predicated region
        $region84: #{res_module_forward.1} parent=70 // pred_check
          %p551 = pneg %p550
        $region85: #{res_module_forward.1} parent=70 // pred_check_branch
          %553 = sbr.rel (%p551) target = $region87
        $region86: #{res_module_forward.1} parent=70 // pred_region
          %554 = vst [vmem:[#allocation2 + $0x18] sm:$0xff] 0.0
        $region87: #{res_module_forward.1} parent=70 // pred_fallthru
          _
        %p555 = scmp.lt.s32.totalorder %s24, 1
        // Predicated region
        $region88: #{res_module_forward.1} parent=70 // pred_check
          %p556 = pneg %p555
        $region89: #{res_module_forward.1} parent=70 // pred_check_branch
          %558 = sbr.rel (%p556) target = $region91
        $region90: #{res_module_forward.1} parent=70 // pred_region
          %v559 = vld [vmem:[%s498] sm:$0xff]
          %v560 = vmul.f32 %v559, %v521
          %v561 = vadd.f32 %v560, %v528
          %v562 = vmax.f32 %v561, 0.0
          %563 = vst [vmem:[#allocation2 + $0x18] sm:$0xff] %v562
        $region91: #{res_module_forward.1} parent=70 // pred_fallthru
          _
        %v564 = vld [vmem:[#allocation2] sm:$0xff]
        %v565 = vld [vmem:[#allocation2 + $0x8] sm:$0xff]
        %v566 = vld [vmem:[#allocation2 + $0x10] sm:$0xff]
        %v567 = vld [vmem:[%s393] ss:$8 sm:$0x3]
        %v569 = vlaneseq
        %v570 = vshrl.u32 %v569, 7
        %v571 = vsub.s32 0, %v570
        %v572 = vrot.slane %v567, %v571
        %v573 = vlaneseq
        %v574 = vshrl.u32 %v573, 7
        %v575 = vsub.s32 1, %v574
        %v576 = vrot.slane %v567, %v575
        %577 = vrot.lane.b32.xlu0 %v572, 55
        %v578 = vpop.permute.xlu0 %577
        %579 = vrot.lane.b32.xlu0 %v576, 55
        %v580 = vpop.permute.xlu0 %579
        %vm581 = vcmask 449536
        %v582 = vsel %vm581, %v578, %v580
        %v586 = vmul.f32 %v564, %v578
        %v587 = vmul.f32 %v565, %v582
        %v588 = vmul.f32 %v566, %v580
        %592 = vrot.lane.b32.xlu0 %v586, 73
        %v593 = vpop.permute.xlu0 %592
        %594 = vrot.lane.b32.xlu0 %v587, 73
        %v595 = vpop.permute.xlu0 %594
        %596 = vrot.lane.b32.xlu0 %v588, 73
        %v597 = vpop.permute.xlu0 %596
        %vm598 = vcmask 596992
        %v599 = vsel %vm598, %v593, %v595
        %v600 = vsel %vm598, %v595, %v597
        %603 = vst [vmem:[#allocation3] sm:$0xff] %v599
        %604 = vst [vmem:[#allocation3 + $0x8] sm:$0xff] %v600
        %v605 = vld [vmem:[#allocation2] sm:$0xff]
        %v606 = vld [vmem:[#allocation2 + $0x8] sm:$0xff]
        %v607 = vld [vmem:[#allocation2 + $0x10] sm:$0xff]
        %s608 = scalar_lea.vmem %s393, 1 [#allocation4]
        %v609 = vld [vmem:[%s608] ss:$8 sm:$0x3]
        %v611 = vlaneseq
        %v612 = vshrl.u32 %v611, 7
        %v613 = vsub.s32 0, %v612
        %v614 = vrot.slane %v609, %v613
        %v615 = vlaneseq
        %v616 = vshrl.u32 %v615, 7
        %v617 = vsub.s32 1, %v616
        %v618 = vrot.slane %v609, %v617
        %619 = vrot.lane.b32.xlu0 %v614, 56
        %v620 = vpop.permute.xlu0 %619
        %621 = vrot.lane.b32.xlu0 %v618, 56
        %v622 = vpop.permute.xlu0 %621
        %vm623 = vcmask 457728
        %v624 = vsel %vm623, %v620, %v622
        %v628 = vmul.f32 %v605, %v620
        %v629 = vmul.f32 %v606, %v624
        %v630 = vmul.f32 %v607, %v622
        %634 = vrot.lane.b32.xlu0 %v628, 72
        %v635 = vpop.permute.xlu0 %634
        %636 = vrot.lane.b32.xlu0 %v629, 72
        %v637 = vpop.permute.xlu0 %636
        %638 = vrot.lane.b32.xlu0 %v630, 72
        %v639 = vpop.permute.xlu0 %638
        %vm640 = vcmask 588800
        %v641 = vsel %vm640, %v635, %v637
        %v642 = vsel %vm640, %v637, %v639
        %645 = vst [vmem:[#allocation3 + $0x10] sm:$0xff] %v641
        %646 = vst [vmem:[#allocation3 + $0x18] sm:$0xff] %v642
        %v647 = vld [vmem:[#allocation2] sm:$0xff]
        %v648 = vld [vmem:[#allocation2 + $0x8] sm:$0xff]
        %v649 = vld [vmem:[#allocation2 + $0x10] sm:$0xff]
        %s650 = scalar_lea.vmem %s393, 2 [#allocation4]
        %v651 = vld [vmem:[%s650] ss:$8 sm:$0x3]
        %v653 = vlaneseq
        %v654 = vshrl.u32 %v653, 7
        %v655 = vsub.s32 0, %v654
        %v656 = vrot.slane %v651, %v655
        %v657 = vlaneseq
        %v658 = vshrl.u32 %v657, 7
        %v659 = vsub.s32 1, %v658
        %v660 = vrot.slane %v651, %v659
        %661 = vrot.lane.b32.xlu0 %v656, 57
        %v662 = vpop.permute.xlu0 %661
        %663 = vrot.lane.b32.xlu0 %v660, 57
        %v664 = vpop.permute.xlu0 %663
        %vm665 = vcmask 465920
        %v666 = vsel %vm665, %v662, %v664
        %v670 = vmul.f32 %v647, %v662
        %v671 = vmul.f32 %v648, %v666
        %v672 = vmul.f32 %v649, %v664
        %676 = vrot.lane.b32.xlu0 %v670, 71
        %v677 = vpop.permute.xlu0 %676
        %678 = vrot.lane.b32.xlu0 %v671, 71
        %v679 = vpop.permute.xlu0 %678
        %680 = vrot.lane.b32.xlu0 %v672, 71
        %v681 = vpop.permute.xlu0 %680
        %vm682 = vcmask 580608
        %v683 = vsel %vm682, %v677, %v679
        %v684 = vsel %vm682, %v679, %v681
        %687 = vst [vmem:[#allocation3 + $0x20] sm:$0xff] %v683
        %688 = vst [vmem:[#allocation3 + $0x28] sm:$0xff] %v684
        %v689 = vld [vmem:[#allocation2] sm:$0xff]
        %v690 = vld [vmem:[#allocation2 + $0x8] sm:$0xff]
        %v691 = vld [vmem:[#allocation2 + $0x10] sm:$0xff]
        %s692 = scalar_lea.vmem %s393, 3 [#allocation4]
        %v693 = vld [vmem:[%s692] ss:$8 sm:$0x3]
        %v695 = vlaneseq
        %v696 = vshrl.u32 %v695, 7
        %v697 = vsub.s32 0, %v696
        %v698 = vrot.slane %v693, %v697
        %v699 = vlaneseq
        %v700 = vshrl.u32 %v699, 7
        %v701 = vsub.s32 1, %v700
        %v702 = vrot.slane %v693, %v701
        %703 = vrot.lane.b32.xlu0 %v698, 63
        %v704 = vpop.permute.xlu0 %703
        %705 = vrot.lane.b32.xlu0 %v702, 63
        %v706 = vpop.permute.xlu0 %705
        %vm707 = vcmask 515072
        %v708 = vsel %vm707, %v704, %v706
        %v712 = vmul.f32 %v689, %v704
        %v713 = vmul.f32 %v690, %v708
        %v714 = vmul.f32 %v691, %v706
        %718 = vrot.lane.b32.xlu0 %v712, 65
        %v719 = vpop.permute.xlu0 %718
        %720 = vrot.lane.b32.xlu0 %v713, 65
        %v721 = vpop.permute.xlu0 %720
        %722 = vrot.lane.b32.xlu0 %v714, 65
        %v723 = vpop.permute.xlu0 %722
        %vm724 = vcmask 531456
        %v725 = vsel %vm724, %v719, %v721
        %v726 = vsel %vm724, %v721, %v723
        %729 = vst [vmem:[#allocation3 + $0x30] sm:$0xff] %v725
        %730 = vst [vmem:[#allocation3 + $0x38] sm:$0xff] %v726
        %v731 = vld [vmem:[#allocation2] sm:$0xff]
        %v732 = vld [vmem:[#allocation2 + $0x8] sm:$0xff]
        %v733 = vld [vmem:[#allocation2 + $0x10] sm:$0xff]
        %s734 = scalar_lea.vmem %s393, 4 [#allocation4]
        %v735 = vld [vmem:[%s734] ss:$8 sm:$0x3]
        %v737 = vlaneseq
        %v738 = vshrl.u32 %v737, 7
        %v739 = vsub.s32 0, %v738
        %v740 = vrot.slane %v735, %v739
        %v741 = vlaneseq
        %v742 = vshrl.u32 %v741, 7
        %v743 = vsub.s32 1, %v742
        %v744 = vrot.slane %v735, %v743
        %745 = vrot.lane.b32.xlu0 %v740, 64
        %v746 = vpop.permute.xlu0 %745
        %747 = vrot.lane.b32.xlu0 %v744, 64
        %v748 = vpop.permute.xlu0 %747
        %vm749 = vcmask 523264
        %v750 = vsel %vm749, %v746, %v748
        %v754 = vmul.f32 %v731, %v746
        %v755 = vmul.f32 %v732, %v750
        %v756 = vmul.f32 %v733, %v748
        %760 = vrot.lane.b32.xlu0 %v754, 64
        %v761 = vpop.permute.xlu0 %760
        %762 = vrot.lane.b32.xlu0 %v755, 64
        %v763 = vpop.permute.xlu0 %762
        %764 = vrot.lane.b32.xlu0 %v756, 64
        %v765 = vpop.permute.xlu0 %764
        %v766 = vsel %vm749, %v761, %v763
        %v767 = vsel %vm749, %v763, %v765
        %770 = vst [vmem:[#allocation3 + $0x40] sm:$0xff] %v766
        %771 = vst [vmem:[#allocation3 + $0x48] sm:$0xff] %v767
        %v772 = vld [vmem:[#allocation2] sm:$0xff]
        %v773 = vld [vmem:[#allocation2 + $0x8] sm:$0xff]
        %v774 = vld [vmem:[#allocation2 + $0x10] sm:$0xff]
        %s775 = scalar_lea.vmem %s393, 5 [#allocation4]
        %v776 = vld [vmem:[%s775] ss:$8 sm:$0x3]
        %v778 = vlaneseq
        %v779 = vshrl.u32 %v778, 7
        %v780 = vsub.s32 0, %v779
        %v781 = vrot.slane %v776, %v780
        %v782 = vlaneseq
        %v783 = vshrl.u32 %v782, 7
        %v784 = vsub.s32 1, %v783
        %v785 = vrot.slane %v776, %v784
        %786 = vrot.lane.b32.xlu0 %v781, 65
        %v787 = vpop.permute.xlu0 %786
        %788 = vrot.lane.b32.xlu0 %v785, 65
        %v789 = vpop.permute.xlu0 %788
        %v790 = vsel %vm724, %v787, %v789
        %v794 = vmul.f32 %v772, %v787
        %v795 = vmul.f32 %v773, %v790
        %v796 = vmul.f32 %v774, %v789
        %800 = vrot.lane.b32.xlu0 %v794, 63
        %v801 = vpop.permute.xlu0 %800
        %802 = vrot.lane.b32.xlu0 %v795, 63
        %v803 = vpop.permute.xlu0 %802
        %804 = vrot.lane.b32.xlu0 %v796, 63
        %v805 = vpop.permute.xlu0 %804
        %v806 = vsel %vm707, %v801, %v803
        %v807 = vsel %vm707, %v803, %v805
        %810 = vst [vmem:[#allocation3 + $0x50] sm:$0xff] %v806
        %811 = vst [vmem:[#allocation3 + $0x58] sm:$0xff] %v807
        %v812 = vld [vmem:[#allocation2] sm:$0xff]
        %v813 = vld [vmem:[#allocation2 + $0x8] sm:$0xff]
        %v814 = vld [vmem:[#allocation2 + $0x10] sm:$0xff]
        %s815 = scalar_lea.vmem %s393, 6 [#allocation4]
        %v816 = vld [vmem:[%s815] ss:$8 sm:$0x3]
        %v818 = vlaneseq
        %v819 = vshrl.u32 %v818, 7
        %v820 = vsub.s32 0, %v819
        %v821 = vrot.slane %v816, %v820
        %v822 = vlaneseq
        %v823 = vshrl.u32 %v822, 7
        %v824 = vsub.s32 1, %v823
        %v825 = vrot.slane %v816, %v824
        %826 = vrot.lane.b32.xlu0 %v821, 71
        %v827 = vpop.permute.xlu0 %826
        %828 = vrot.lane.b32.xlu0 %v825, 71
        %v829 = vpop.permute.xlu0 %828
        %v830 = vsel %vm682, %v827, %v829
        %v834 = vmul.f32 %v812, %v827
        %v835 = vmul.f32 %v813, %v830
        %v836 = vmul.f32 %v814, %v829
        %840 = vrot.lane.b32.xlu0 %v834, 57
        %v841 = vpop.permute.xlu0 %840
        %842 = vrot.lane.b32.xlu0 %v835, 57
        %v843 = vpop.permute.xlu0 %842
        %844 = vrot.lane.b32.xlu0 %v836, 57
        %v845 = vpop.permute.xlu0 %844
        %v846 = vsel %vm665, %v841, %v843
        %v847 = vsel %vm665, %v843, %v845
        %850 = vst [vmem:[#allocation3 + $0x60] sm:$0xff] %v846
        %851 = vst [vmem:[#allocation3 + $0x68] sm:$0xff] %v847
        %v852 = vld [vmem:[#allocation2] sm:$0xff]
        %v853 = vld [vmem:[#allocation2 + $0x8] sm:$0xff]
        %v854 = vld [vmem:[#allocation2 + $0x10] sm:$0xff]
        %s855 = scalar_lea.vmem %s393, 7 [#allocation4]
        %v856 = vld [vmem:[%s855] ss:$8 sm:$0x3]
        %v858 = vlaneseq
        %v859 = vshrl.u32 %v858, 7
        %v860 = vsub.s32 0, %v859
        %v861 = vrot.slane %v856, %v860
        %v862 = vlaneseq
        %v863 = vshrl.u32 %v862, 7
        %v864 = vsub.s32 1, %v863
        %v865 = vrot.slane %v856, %v864
        %866 = vrot.lane.b32.xlu0 %v861, 72
        %v867 = vpop.permute.xlu0 %866
        %868 = vrot.lane.b32.xlu0 %v865, 72
        %v869 = vpop.permute.xlu0 %868
        %v870 = vsel %vm640, %v867, %v869
        %v874 = vmul.f32 %v852, %v867
        %v875 = vmul.f32 %v853, %v870
        %v876 = vmul.f32 %v854, %v869
        %880 = vrot.lane.b32.xlu0 %v874, 56
        %v881 = vpop.permute.xlu0 %880
        %882 = vrot.lane.b32.xlu0 %v875, 56
        %v883 = vpop.permute.xlu0 %882
        %884 = vrot.lane.b32.xlu0 %v876, 56
        %v885 = vpop.permute.xlu0 %884
        %v886 = vsel %vm623, %v881, %v883
        %v887 = vsel %vm623, %v883, %v885
        %890 = vst [vmem:[#allocation3 + $0x70] sm:$0xff] %v886
        %891 = vst [vmem:[#allocation3 + $0x78] sm:$0xff] %v887
        %v892 = vld [vmem:[#allocation2] sm:$0xff]
        %v893 = vld [vmem:[#allocation2 + $0x8] sm:$0xff]
        %v894 = vld [vmem:[#allocation2 + $0x10] sm:$0xff]
        %s895 = scalar_lea.vmem %s393, 16 [#allocation4]
        %v896 = vld [vmem:[%s895] ss:$8 sm:$0x3]
        %v898 = vlaneseq
        %v899 = vshrl.u32 %v898, 7
        %v900 = vsub.s32 0, %v899
        %v901 = vrot.slane %v896, %v900
        %v902 = vlaneseq
        %v903 = vshrl.u32 %v902, 7
        %v904 = vsub.s32 1, %v903
        %v905 = vrot.slane %v896, %v904
        %906 = vrot.lane.b32.xlu0 %v901, 73
        %v907 = vpop.permute.xlu0 %906
        %908 = vrot.lane.b32.xlu0 %v905, 73
        %v909 = vpop.permute.xlu0 %908
        %v910 = vsel %vm598, %v907, %v909
        %v914 = vmul.f32 %v892, %v907
        %v915 = vmul.f32 %v893, %v910
        %v916 = vmul.f32 %v894, %v909
        %920 = vrot.lane.b32.xlu0 %v914, 55
        %v921 = vpop.permute.xlu0 %920
        %922 = vrot.lane.b32.xlu0 %v915, 55
        %v923 = vpop.permute.xlu0 %922
        %924 = vrot.lane.b32.xlu0 %v916, 55
        %v925 = vpop.permute.xlu0 %924
        %v926 = vsel %vm581, %v921, %v923
        %v927 = vsel %vm581, %v923, %v925
        %930 = vst [vmem:[#allocation3 + $0x80] sm:$0xff] %v926
        %931 = vst [vmem:[#allocation3 + $0x88] sm:$0xff] %v927
        %v932 = vld [vmem:[#allocation2] sm:$0xff]
        %v933 = vld [vmem:[#allocation2 + $0x8] sm:$0xff]
        %v934 = vld [vmem:[#allocation2 + $0x10] sm:$0xff]
        %s935 = scalar_lea.vmem %s393, 17 [#allocation4]
        %v936 = vld [vmem:[%s935] ss:$8 sm:$0x3]
        %v938 = vlaneseq
        %v939 = vshrl.u32 %v938, 7
        %v940 = vsub.s32 0, %v939
        %v941 = vrot.slane %v936, %v940
        %v942 = vlaneseq
        %v943 = vshrl.u32 %v942, 7
        %v944 = vsub.s32 1, %v943
        %v945 = vrot.slane %v936, %v944
        %946 = vrot.lane.b32.xlu0 %v941, 119
        %v947 = vpop.permute.xlu0 %946
        %948 = vrot.lane.b32.xlu0 %v945, 119
        %v949 = vpop.permute.xlu0 %948
        %vm950 = vcmask 973824
        %v951 = vsel %vm950, %v947, %v949
        %v955 = vmul.f32 %v932, %v947
        %v956 = vmul.f32 %v933, %v951
        %v957 = vmul.f32 %v934, %v949
        %961 = vrot.lane.b32.xlu0 %v955, 9
        %v962 = vpop.permute.xlu0 %961
        %963 = vrot.lane.b32.xlu0 %v956, 9
        %v964 = vpop.permute.xlu0 %963
        %965 = vrot.lane.b32.xlu0 %v957, 9
        %v966 = vpop.permute.xlu0 %965
        %vm967 = vcmask 72704
        %v968 = vsel %vm967, %v962, %v964
        %v969 = vsel %vm967, %v964, %v966
        %972 = vst [vmem:[#allocation3 + $0x90] sm:$0xff] %v968
        %973 = vst [vmem:[#allocation3 + $0x98] sm:$0xff] %v969
        %v974 = vld [vmem:[#allocation2] sm:$0xff]
        %v975 = vld [vmem:[#allocation2 + $0x8] sm:$0xff]
        %v976 = vld [vmem:[#allocation2 + $0x10] sm:$0xff]
        %s977 = scalar_lea.vmem %s393, 18 [#allocation4]
        %v978 = vld [vmem:[%s977] ss:$8 sm:$0x3]
        %v980 = vlaneseq
        %v981 = vshrl.u32 %v980, 7
        %v982 = vsub.s32 0, %v981
        %v983 = vrot.slane %v978, %v982
        %v984 = vlaneseq
        %v985 = vshrl.u32 %v984, 7
        %v986 = vsub.s32 1, %v985
        %v987 = vrot.slane %v978, %v986
        %988 = vrot.lane.b32.xlu0 %v983, 120
        %v989 = vpop.permute.xlu0 %988
        %990 = vrot.lane.b32.xlu0 %v987, 120
        %v991 = vpop.permute.xlu0 %990
        %vm992 = vcmask 982016
        %v993 = vsel %vm992, %v989, %v991
        %v997 = vmul.f32 %v974, %v989
        %v998 = vmul.f32 %v975, %v993
        %v999 = vmul.f32 %v976, %v991
        %1003 = vrot.lane.b32.xlu0 %v997, 8
        %v1004 = vpop.permute.xlu0 %1003
        %1005 = vrot.lane.b32.xlu0 %v998, 8
        %v1006 = vpop.permute.xlu0 %1005
        %1007 = vrot.lane.b32.xlu0 %v999, 8
        %v1008 = vpop.permute.xlu0 %1007
        %vm1009 = vcmask 64512
        %v1010 = vsel %vm1009, %v1004, %v1006
        %v1011 = vsel %vm1009, %v1006, %v1008
        %1014 = vst [vmem:[#allocation3 + $0xa0] sm:$0xff] %v1010
        %1015 = vst [vmem:[#allocation3 + $0xa8] sm:$0xff] %v1011
        %v1016 = vld [vmem:[#allocation2] sm:$0xff]
        %v1017 = vld [vmem:[#allocation2 + $0x8] sm:$0xff]
        %v1018 = vld [vmem:[#allocation2 + $0x10] sm:$0xff]
        %s1019 = scalar_lea.vmem %s393, 19 [#allocation4]
        %v1020 = vld [vmem:[%s1019] ss:$8 sm:$0x3]
        %v1022 = vlaneseq
        %v1023 = vshrl.u32 %v1022, 7
        %v1024 = vsub.s32 0, %v1023
        %v1025 = vrot.slane %v1020, %v1024
        %v1026 = vlaneseq
        %v1027 = vshrl.u32 %v1026, 7
        %v1028 = vsub.s32 1, %v1027
        %v1029 = vrot.slane %v1020, %v1028
        %1030 = vrot.lane.b32.xlu0 %v1025, 121
        %v1031 = vpop.permute.xlu0 %1030
        %1032 = vrot.lane.b32.xlu0 %v1029, 121
        %v1033 = vpop.permute.xlu0 %1032
        %vm1034 = vcmask 990208
        %v1035 = vsel %vm1034, %v1031, %v1033
        %v1039 = vmul.f32 %v1016, %v1031
        %v1040 = vmul.f32 %v1017, %v1035
        %v1041 = vmul.f32 %v1018, %v1033
        %1045 = vrot.lane.b32.xlu0 %v1039, 7
        %v1046 = vpop.permute.xlu0 %1045
        %1047 = vrot.lane.b32.xlu0 %v1040, 7
        %v1048 = vpop.permute.xlu0 %1047
        %1049 = vrot.lane.b32.xlu0 %v1041, 7
        %v1050 = vpop.permute.xlu0 %1049
        %vm1051 = vcmask 56320
        %v1052 = vsel %vm1051, %v1046, %v1048
        %v1053 = vsel %vm1051, %v1048, %v1050
        %1056 = vst [vmem:[#allocation3 + $0xb0] sm:$0xff] %v1052
        %1057 = vst [vmem:[#allocation3 + $0xb8] sm:$0xff] %v1053
        %v1058 = vld [vmem:[#allocation2] sm:$0xff]
        %v1059 = vld [vmem:[#allocation2 + $0x8] sm:$0xff]
        %v1060 = vld [vmem:[#allocation2 + $0x10] sm:$0xff]
        %s1061 = scalar_lea.vmem %s393, 20 [#allocation4]
        %v1062 = vld [vmem:[%s1061] ss:$8 sm:$0x3]
        %v1064 = vlaneseq
        %v1065 = vshrl.u32 %v1064, 7
        %v1066 = vsub.s32 0, %v1065
        %v1067 = vrot.slane %v1062, %v1066
        %v1068 = vlaneseq
        %v1069 = vshrl.u32 %v1068, 7
        %v1070 = vsub.s32 1, %v1069
        %v1071 = vrot.slane %v1062, %v1070
        %1072 = vrot.lane.b32.xlu0 %v1067, 127
        %v1073 = vpop.permute.xlu0 %1072
        %1074 = vrot.lane.b32.xlu0 %v1071, 127
        %v1075 = vpop.permute.xlu0 %1074
        %vm1076 = vcmask 1039360
        %v1077 = vsel %vm1076, %v1073, %v1075
        %v1081 = vmul.f32 %v1058, %v1073
        %v1082 = vmul.f32 %v1059, %v1077
        %v1083 = vmul.f32 %v1060, %v1075
        %1087 = vrot.lane.b32.xlu0 %v1081, 1
        %v1088 = vpop.permute.xlu0 %1087
        %1089 = vrot.lane.b32.xlu0 %v1082, 1
        %v1090 = vpop.permute.xlu0 %1089
        %1091 = vrot.lane.b32.xlu0 %v1083, 1
        %v1092 = vpop.permute.xlu0 %1091
        %vm1093 = vcmask 7168
        %v1094 = vsel %vm1093, %v1088, %v1090
        %v1095 = vsel %vm1093, %v1090, %v1092
        %1098 = vst [vmem:[#allocation3 + $0xc0] sm:$0xff] %v1094
        %1099 = vst [vmem:[#allocation3 + $0xc8] sm:$0xff] %v1095
        %v1100 = vld [vmem:[#allocation2 + $0x8] sm:$0xff]
        %v1101 = vld [vmem:[#allocation2 + $0x10] sm:$0xff]
        %s1102 = scalar_lea.vmem %s393, 21 [#allocation4]
        %v1103 = vld [vmem:[%s1102] ss:$8 sm:$0x3]
        %v1105 = vlaneseq
        %v1106 = vshrl.u32 %v1105, 7
        %v1107 = vsub.s32 0, %v1106
        %v1108 = vrot.slane %v1103, %v1107
        %v1109 = vlaneseq
        %v1110 = vshrl.u32 %v1109, 7
        %v1111 = vsub.s32 1, %v1110
        %v1112 = vrot.slane %v1103, %v1111
        %v1115 = vmul.f32 %v1100, %v1108
        %v1116 = vmul.f32 %v1101, %v1112
        %1117 = vst [vmem:[#allocation3 + $0xd0] sm:$0xff] %v1115
        %1118 = vst [vmem:[#allocation3 + $0xd8] sm:$0xff] %v1116
        %v1119 = vld [vmem:[#allocation2 + $0x8] sm:$0xff]
        %v1120 = vld [vmem:[#allocation2 + $0x10] sm:$0xff]
        %v1121 = vld [vmem:[#allocation2 + $0x18] sm:$0xff]
        %s1122 = scalar_lea.vmem %s393, 22 [#allocation4]
        %v1123 = vld [vmem:[%s1122] ss:$8 sm:$0x3]
        %v1125 = vlaneseq
        %v1126 = vshrl.u32 %v1125, 7
        %v1127 = vsub.s32 0, %v1126
        %v1128 = vrot.slane %v1123, %v1127
        %v1129 = vlaneseq
        %v1130 = vshrl.u32 %v1129, 7
        %v1131 = vsub.s32 1, %v1130
        %v1132 = vrot.slane %v1123, %v1131
        %1133 = vrot.lane.b32.xlu0 %v1128, 1
        %v1134 = vpop.permute.xlu0 %1133
        %1135 = vrot.lane.b32.xlu0 %v1132, 1
        %v1136 = vpop.permute.xlu0 %1135
        %v1137 = vsel %vm1093, %v1134, %v1136
        %v1141 = vmul.f32 %v1119, %v1134
        %v1142 = vmul.f32 %v1120, %v1137
        %v1143 = vmul.f32 %v1121, %v1136
        %1147 = vrot.lane.b32.xlu0 %v1141, 127
        %v1148 = vpop.permute.xlu0 %1147
        %1149 = vrot.lane.b32.xlu0 %v1142, 127
        %v1150 = vpop.permute.xlu0 %1149
        %1151 = vrot.lane.b32.xlu0 %v1143, 127
        %v1152 = vpop.permute.xlu0 %1151
        %v1153 = vsel %vm1076, %v1148, %v1150
        %v1154 = vsel %vm1076, %v1150, %v1152
        %1157 = vst [vmem:[#allocation3 + $0xe0] sm:$0xff] %v1153
        %1158 = vst [vmem:[#allocation3 + $0xe8] sm:$0xff] %v1154
        %v1159 = vld [vmem:[#allocation2 + $0x8] sm:$0xff]
        %v1160 = vld [vmem:[#allocation2 + $0x10] sm:$0xff]
        %v1161 = vld [vmem:[#allocation2 + $0x18] sm:$0xff]
        %s1162 = scalar_lea.vmem %s393, 23 [#allocation4]
        %v1163 = vld [vmem:[%s1162] ss:$8 sm:$0x3]
        %v1165 = vlaneseq
        %v1166 = vshrl.u32 %v1165, 7
        %v1167 = vsub.s32 0, %v1166
        %v1168 = vrot.slane %v1163, %v1167
        %v1169 = vlaneseq
        %v1170 = vshrl.u32 %v1169, 7
        %v1171 = vsub.s32 1, %v1170
        %v1172 = vrot.slane %v1163, %v1171
        %1173 = vrot.lane.b32.xlu0 %v1168, 7
        %v1174 = vpop.permute.xlu0 %1173
        %1175 = vrot.lane.b32.xlu0 %v1172, 7
        %v1176 = vpop.permute.xlu0 %1175
        %v1177 = vsel %vm1051, %v1174, %v1176
        %v1181 = vmul.f32 %v1159, %v1174
        %v1182 = vmul.f32 %v1160, %v1177
        %v1183 = vmul.f32 %v1161, %v1176
        %1187 = vrot.lane.b32.xlu0 %v1181, 121
        %v1188 = vpop.permute.xlu0 %1187
        %1189 = vrot.lane.b32.xlu0 %v1182, 121
        %v1190 = vpop.permute.xlu0 %1189
        %1191 = vrot.lane.b32.xlu0 %v1183, 121
        %v1192 = vpop.permute.xlu0 %1191
        %v1193 = vsel %vm1034, %v1188, %v1190
        %v1194 = vsel %vm1034, %v1190, %v1192
        %1197 = vst [vmem:[#allocation3 + $0xf0] sm:$0xff] %v1193
        %1198 = vst [vmem:[#allocation3 + $0xf8] sm:$0xff] %v1194
        %v1199 = vld [vmem:[#allocation2 + $0x8] sm:$0xff]
        %v1200 = vld [vmem:[#allocation2 + $0x10] sm:$0xff]
        %v1201 = vld [vmem:[#allocation2 + $0x18] sm:$0xff]
        %s1202 = scalar_lea.vmem %s393, 32 [#allocation4]
        %v1203 = vld [vmem:[%s1202] ss:$8 sm:$0x3]
        %v1205 = vlaneseq
        %v1206 = vshrl.u32 %v1205, 7
        %v1207 = vsub.s32 0, %v1206
        %v1208 = vrot.slane %v1203, %v1207
        %v1209 = vlaneseq
        %v1210 = vshrl.u32 %v1209, 7
        %v1211 = vsub.s32 1, %v1210
        %v1212 = vrot.slane %v1203, %v1211
        %1213 = vrot.lane.b32.xlu0 %v1208, 8
        %v1214 = vpop.permute.xlu0 %1213
        %1215 = vrot.lane.b32.xlu0 %v1212, 8
        %v1216 = vpop.permute.xlu0 %1215
        %v1217 = vsel %vm1009, %v1214, %v1216
        %v1221 = vmul.f32 %v1199, %v1214
        %v1222 = vmul.f32 %v1200, %v1217
        %v1223 = vmul.f32 %v1201, %v1216
        %1227 = vrot.lane.b32.xlu0 %v1221, 120
        %v1228 = vpop.permute.xlu0 %1227
        %1229 = vrot.lane.b32.xlu0 %v1222, 120
        %v1230 = vpop.permute.xlu0 %1229
        %1231 = vrot.lane.b32.xlu0 %v1223, 120
        %v1232 = vpop.permute.xlu0 %1231
        %v1233 = vsel %vm992, %v1228, %v1230
        %v1234 = vsel %vm992, %v1230, %v1232
        %1237 = vst [vmem:[#allocation3 + $0x100] sm:$0xff] %v1233
        %1238 = vst [vmem:[#allocation3 + $0x108] sm:$0xff] %v1234
        %v1239 = vld [vmem:[#allocation2 + $0x8] sm:$0xff]
        %v1240 = vld [vmem:[#allocation2 + $0x10] sm:$0xff]
        %v1241 = vld [vmem:[#allocation2 + $0x18] sm:$0xff]
        %s1242 = scalar_lea.vmem %s393, 33 [#allocation4]
        %v1243 = vld [vmem:[%s1242] ss:$8 sm:$0x3]
        %v1245 = vlaneseq
        %v1246 = vshrl.u32 %v1245, 7
        %v1247 = vsub.s32 0, %v1246
        %v1248 = vrot.slane %v1243, %v1247
        %v1249 = vlaneseq
        %v1250 = vshrl.u32 %v1249, 7
        %v1251 = vsub.s32 1, %v1250
        %v1252 = vrot.slane %v1243, %v1251
        %1253 = vrot.lane.b32.xlu0 %v1248, 9
        %v1254 = vpop.permute.xlu0 %1253
        %1255 = vrot.lane.b32.xlu0 %v1252, 9
        %v1256 = vpop.permute.xlu0 %1255
        %v1257 = vsel %vm967, %v1254, %v1256
        %v1261 = vmul.f32 %v1239, %v1254
        %v1262 = vmul.f32 %v1240, %v1257
        %v1263 = vmul.f32 %v1241, %v1256
        %1267 = vrot.lane.b32.xlu0 %v1261, 119
        %v1268 = vpop.permute.xlu0 %1267
        %1269 = vrot.lane.b32.xlu0 %v1262, 119
        %v1270 = vpop.permute.xlu0 %1269
        %1271 = vrot.lane.b32.xlu0 %v1263, 119
        %v1272 = vpop.permute.xlu0 %1271
        %v1273 = vsel %vm950, %v1268, %v1270
        %v1274 = vsel %vm950, %v1270, %v1272
        %1277 = vst [vmem:[#allocation3 + $0x110] sm:$0xff] %v1273
        %1278 = vst [vmem:[#allocation3 + $0x118] sm:$0xff] %v1274
        %v1279 = vld [vmem:[#allocation2 + $0x8] sm:$0xff]
        %v1280 = vld [vmem:[#allocation2 + $0x10] sm:$0xff]
        %v1281 = vld [vmem:[#allocation2 + $0x18] sm:$0xff]
        %s1282 = scalar_lea.vmem %s393, 34 [#allocation4]
        %v1283 = vld [vmem:[%s1282] ss:$8 sm:$0x3]
        %v1285 = vlaneseq
        %v1286 = vshrl.u32 %v1285, 7
        %v1287 = vsub.s32 0, %v1286
        %v1288 = vrot.slane %v1283, %v1287
        %v1289 = vlaneseq
        %v1290 = vshrl.u32 %v1289, 7
        %v1291 = vsub.s32 1, %v1290
        %v1292 = vrot.slane %v1283, %v1291
        %1293 = vrot.lane.b32.xlu0 %v1288, 55
        %v1294 = vpop.permute.xlu0 %1293
        %1295 = vrot.lane.b32.xlu0 %v1292, 55
        %v1296 = vpop.permute.xlu0 %1295
        %v1297 = vsel %vm581, %v1294, %v1296
        %v1301 = vmul.f32 %v1279, %v1294
        %v1302 = vmul.f32 %v1280, %v1297
        %v1303 = vmul.f32 %v1281, %v1296
        %1307 = vrot.lane.b32.xlu0 %v1301, 73
        %v1308 = vpop.permute.xlu0 %1307
        %1309 = vrot.lane.b32.xlu0 %v1302, 73
        %v1310 = vpop.permute.xlu0 %1309
        %1311 = vrot.lane.b32.xlu0 %v1303, 73
        %v1312 = vpop.permute.xlu0 %1311
        %v1313 = vsel %vm598, %v1308, %v1310
        %v1314 = vsel %vm598, %v1310, %v1312
        %1317 = vst [vmem:[#allocation3 + $0x120] sm:$0xff] %v1313
        %1318 = vst [vmem:[#allocation3 + $0x128] sm:$0xff] %v1314
        %v1319 = vld [vmem:[#allocation2 + $0x8] sm:$0xff]
        %v1320 = vld [vmem:[#allocation2 + $0x10] sm:$0xff]
        %v1321 = vld [vmem:[#allocation2 + $0x18] sm:$0xff]
        %s1322 = scalar_lea.vmem %s393, 35 [#allocation4]
        %v1323 = vld [vmem:[%s1322] ss:$8 sm:$0x3]
        %v1325 = vlaneseq
        %v1326 = vshrl.u32 %v1325, 7
        %v1327 = vsub.s32 0, %v1326
        %v1328 = vrot.slane %v1323, %v1327
        %v1329 = vlaneseq
        %v1330 = vshrl.u32 %v1329, 7
        %v1331 = vsub.s32 1, %v1330
        %v1332 = vrot.slane %v1323, %v1331
        %1333 = vrot.lane.b32.xlu0 %v1328, 56
        %v1334 = vpop.permute.xlu0 %1333
        %1335 = vrot.lane.b32.xlu0 %v1332, 56
        %v1336 = vpop.permute.xlu0 %1335
        %v1337 = vsel %vm623, %v1334, %v1336
        %v1341 = vmul.f32 %v1319, %v1334
        %v1342 = vmul.f32 %v1320, %v1337
        %v1343 = vmul.f32 %v1321, %v1336
        %1347 = vrot.lane.b32.xlu0 %v1341, 72
        %v1348 = vpop.permute.xlu0 %1347
        %1349 = vrot.lane.b32.xlu0 %v1342, 72
        %v1350 = vpop.permute.xlu0 %1349
        %1351 = vrot.lane.b32.xlu0 %v1343, 72
        %v1352 = vpop.permute.xlu0 %1351
        %v1353 = vsel %vm640, %v1348, %v1350
        %v1354 = vsel %vm640, %v1350, %v1352
        %1357 = vst [vmem:[#allocation3 + $0x130] sm:$0xff] %v1353
        %1358 = vst [vmem:[#allocation3 + $0x138] sm:$0xff] %v1354
        %v1359 = vld [vmem:[#allocation2 + $0x8] sm:$0xff]
        %v1360 = vld [vmem:[#allocation2 + $0x10] sm:$0xff]
        %v1361 = vld [vmem:[#allocation2 + $0x18] sm:$0xff]
        %s1362 = scalar_lea.vmem %s393, 36 [#allocation4]
        %v1363 = vld [vmem:[%s1362] ss:$8 sm:$0x3]
        %v1365 = vlaneseq
        %v1366 = vshrl.u32 %v1365, 7
        %v1367 = vsub.s32 0, %v1366
        %v1368 = vrot.slane %v1363, %v1367
        %v1369 = vlaneseq
        %v1370 = vshrl.u32 %v1369, 7
        %v1371 = vsub.s32 1, %v1370
        %v1372 = vrot.slane %v1363, %v1371
        %1373 = vrot.lane.b32.xlu0 %v1368, 57
        %v1374 = vpop.permute.xlu0 %1373
        %1375 = vrot.lane.b32.xlu0 %v1372, 57
        %v1376 = vpop.permute.xlu0 %1375
        %v1377 = vsel %vm665, %v1374, %v1376
        %v1381 = vmul.f32 %v1359, %v1374
        %v1382 = vmul.f32 %v1360, %v1377
        %v1383 = vmul.f32 %v1361, %v1376
        %1387 = vrot.lane.b32.xlu0 %v1381, 71
        %v1388 = vpop.permute.xlu0 %1387
        %1389 = vrot.lane.b32.xlu0 %v1382, 71
        %v1390 = vpop.permute.xlu0 %1389
        %1391 = vrot.lane.b32.xlu0 %v1383, 71
        %v1392 = vpop.permute.xlu0 %1391
        %v1393 = vsel %vm682, %v1388, %v1390
        %v1394 = vsel %vm682, %v1390, %v1392
        %1397 = vst [vmem:[#allocation3 + $0x140] sm:$0xff] %v1393
        %1398 = vst [vmem:[#allocation3 + $0x148] sm:$0xff] %v1394
        %v1399 = vld [vmem:[#allocation2 + $0x8] sm:$0xff]
        %v1400 = vld [vmem:[#allocation2 + $0x10] sm:$0xff]
        %v1401 = vld [vmem:[#allocation2 + $0x18] sm:$0xff]
        %s1402 = scalar_lea.vmem %s393, 37 [#allocation4]
        %v1403 = vld [vmem:[%s1402] ss:$8 sm:$0x3]
        %v1405 = vlaneseq
        %v1406 = vshrl.u32 %v1405, 7
        %v1407 = vsub.s32 0, %v1406
        %v1408 = vrot.slane %v1403, %v1407
        %v1409 = vlaneseq
        %v1410 = vshrl.u32 %v1409, 7
        %v1411 = vsub.s32 1, %v1410
        %v1412 = vrot.slane %v1403, %v1411
        %1413 = vrot.lane.b32.xlu0 %v1408, 63
        %v1414 = vpop.permute.xlu0 %1413
        %1415 = vrot.lane.b32.xlu0 %v1412, 63
        %v1416 = vpop.permute.xlu0 %1415
        %v1417 = vsel %vm707, %v1414, %v1416
        %v1421 = vmul.f32 %v1399, %v1414
        %v1422 = vmul.f32 %v1400, %v1417
        %v1423 = vmul.f32 %v1401, %v1416
        %1427 = vrot.lane.b32.xlu0 %v1421, 65
        %v1428 = vpop.permute.xlu0 %1427
        %1429 = vrot.lane.b32.xlu0 %v1422, 65
        %v1430 = vpop.permute.xlu0 %1429
        %1431 = vrot.lane.b32.xlu0 %v1423, 65
        %v1432 = vpop.permute.xlu0 %1431
        %v1433 = vsel %vm724, %v1428, %v1430
        %v1434 = vsel %vm724, %v1430, %v1432
        %1437 = vst [vmem:[#allocation3 + $0x150] sm:$0xff] %v1433
        %1438 = vst [vmem:[#allocation3 + $0x158] sm:$0xff] %v1434
        %v1439 = vld [vmem:[#allocation2 + $0x8] sm:$0xff]
        %v1440 = vld [vmem:[#allocation2 + $0x10] sm:$0xff]
        %v1441 = vld [vmem:[#allocation2 + $0x18] sm:$0xff]
        %s1442 = scalar_lea.vmem %s393, 38 [#allocation4]
        %v1443 = vld [vmem:[%s1442] ss:$8 sm:$0x3]
        %v1445 = vlaneseq
        %v1446 = vshrl.u32 %v1445, 7
        %v1447 = vsub.s32 0, %v1446
        %v1448 = vrot.slane %v1443, %v1447
        %v1449 = vlaneseq
        %v1450 = vshrl.u32 %v1449, 7
        %v1451 = vsub.s32 1, %v1450
        %v1452 = vrot.slane %v1443, %v1451
        %1453 = vrot.lane.b32.xlu0 %v1448, 64
        %v1454 = vpop.permute.xlu0 %1453
        %1455 = vrot.lane.b32.xlu0 %v1452, 64
        %v1456 = vpop.permute.xlu0 %1455
        %v1457 = vsel %vm749, %v1454, %v1456
        %v1461 = vmul.f32 %v1439, %v1454
        %v1462 = vmul.f32 %v1440, %v1457
        %v1463 = vmul.f32 %v1441, %v1456
        %1467 = vrot.lane.b32.xlu0 %v1461, 64
        %v1468 = vpop.permute.xlu0 %1467
        %1469 = vrot.lane.b32.xlu0 %v1462, 64
        %v1470 = vpop.permute.xlu0 %1469
        %1471 = vrot.lane.b32.xlu0 %v1463, 64
        %v1472 = vpop.permute.xlu0 %1471
        %v1473 = vsel %vm749, %v1468, %v1470
        %v1474 = vsel %vm749, %v1470, %v1472
        %1477 = vst [vmem:[#allocation3 + $0x160] sm:$0xff] %v1473
        %1478 = vst [vmem:[#allocation3 + $0x168] sm:$0xff] %v1474
        %v1479 = vld [vmem:[#allocation2 + $0x8] sm:$0xff]
        %v1480 = vld [vmem:[#allocation2 + $0x10] sm:$0xff]
        %v1481 = vld [vmem:[#allocation2 + $0x18] sm:$0xff]
        %s1482 = scalar_lea.vmem %s393, 39 [#allocation4]
        %v1483 = vld [vmem:[%s1482] ss:$8 sm:$0x3]
        %v1485 = vlaneseq
        %v1486 = vshrl.u32 %v1485, 7
        %v1487 = vsub.s32 0, %v1486
        %v1488 = vrot.slane %v1483, %v1487
        %v1489 = vlaneseq
        %v1490 = vshrl.u32 %v1489, 7
        %v1491 = vsub.s32 1, %v1490
        %v1492 = vrot.slane %v1483, %v1491
        %1493 = vrot.lane.b32.xlu0 %v1488, 65
        %v1494 = vpop.permute.xlu0 %1493
        %1495 = vrot.lane.b32.xlu0 %v1492, 65
        %v1496 = vpop.permute.xlu0 %1495
        %v1497 = vsel %vm724, %v1494, %v1496
        %v1501 = vmul.f32 %v1479, %v1494
        %v1502 = vmul.f32 %v1480, %v1497
        %v1503 = vmul.f32 %v1481, %v1496
        %1507 = vrot.lane.b32.xlu0 %v1501, 63
        %v1508 = vpop.permute.xlu0 %1507
        %1509 = vrot.lane.b32.xlu0 %v1502, 63
        %v1510 = vpop.permute.xlu0 %1509
        %1511 = vrot.lane.b32.xlu0 %v1503, 63
        %v1512 = vpop.permute.xlu0 %1511
        %v1513 = vsel %vm707, %v1508, %v1510
        %v1514 = vsel %vm707, %v1510, %v1512
        %1517 = vst [vmem:[#allocation3 + $0x170] sm:$0xff] %v1513
        %1518 = vst [vmem:[#allocation3 + $0x178] sm:$0xff] %v1514
        %v1519 = vld [vmem:[#allocation2 + $0x8] sm:$0xff]
        %v1520 = vld [vmem:[#allocation2 + $0x10] sm:$0xff]
        %v1521 = vld [vmem:[#allocation2 + $0x18] sm:$0xff]
        %s1522 = scalar_lea.vmem %s393, 48 [#allocation4]
        %v1523 = vld [vmem:[%s1522] ss:$8 sm:$0x3]
        %v1525 = vlaneseq
        %v1526 = vshrl.u32 %v1525, 7
        %v1527 = vsub.s32 0, %v1526
        %v1528 = vrot.slane %v1523, %v1527
        %v1529 = vlaneseq
        %v1530 = vshrl.u32 %v1529, 7
        %v1531 = vsub.s32 1, %v1530
        %v1532 = vrot.slane %v1523, %v1531
        %1533 = vrot.lane.b32.xlu0 %v1528, 71
        %v1534 = vpop.permute.xlu0 %1533
        %1535 = vrot.lane.b32.xlu0 %v1532, 71
        %v1536 = vpop.permute.xlu0 %1535
        %v1537 = vsel %vm682, %v1534, %v1536
        %v1541 = vmul.f32 %v1519, %v1534
        %v1542 = vmul.f32 %v1520, %v1537
        %v1543 = vmul.f32 %v1521, %v1536
        %1547 = vrot.lane.b32.xlu0 %v1541, 57
        %v1548 = vpop.permute.xlu0 %1547
        %1549 = vrot.lane.b32.xlu0 %v1542, 57
        %v1550 = vpop.permute.xlu0 %1549
        %1551 = vrot.lane.b32.xlu0 %v1543, 57
        %v1552 = vpop.permute.xlu0 %1551
        %v1553 = vsel %vm665, %v1548, %v1550
        %v1554 = vsel %vm665, %v1550, %v1552
        %1557 = vst [vmem:[#allocation3 + $0x180] sm:$0xff] %v1553
        %1558 = vst [vmem:[#allocation3 + $0x188] sm:$0xff] %v1554
        %v1559 = vld [vmem:[#allocation2 + $0x8] sm:$0xff]
        %v1560 = vld [vmem:[#allocation2 + $0x10] sm:$0xff]
        %v1561 = vld [vmem:[#allocation2 + $0x18] sm:$0xff]
        %s1562 = scalar_lea.vmem %s393, 49 [#allocation4]
        %v1563 = vld [vmem:[%s1562] ss:$8 sm:$0x3]
        %v1565 = vlaneseq
        %v1566 = vshrl.u32 %v1565, 7
        %v1567 = vsub.s32 0, %v1566
        %v1568 = vrot.slane %v1563, %v1567
        %v1569 = vlaneseq
        %v1570 = vshrl.u32 %v1569, 7
        %v1571 = vsub.s32 1, %v1570
        %v1572 = vrot.slane %v1563, %v1571
        %1573 = vrot.lane.b32.xlu0 %v1568, 72
        %v1574 = vpop.permute.xlu0 %1573
        %1575 = vrot.lane.b32.xlu0 %v1572, 72
        %v1576 = vpop.permute.xlu0 %1575
        %v1577 = vsel %vm640, %v1574, %v1576
        %v1581 = vmul.f32 %v1559, %v1574
        %v1582 = vmul.f32 %v1560, %v1577
        %v1583 = vmul.f32 %v1561, %v1576
        %1587 = vrot.lane.b32.xlu0 %v1581, 56
        %v1588 = vpop.permute.xlu0 %1587
        %1589 = vrot.lane.b32.xlu0 %v1582, 56
        %v1590 = vpop.permute.xlu0 %1589
        %1591 = vrot.lane.b32.xlu0 %v1583, 56
        %v1592 = vpop.permute.xlu0 %1591
        %v1593 = vsel %vm623, %v1588, %v1590
        %v1594 = vsel %vm623, %v1590, %v1592
        %1597 = vst [vmem:[#allocation3 + $0x190] sm:$0xff] %v1593
        %1598 = vst [vmem:[#allocation3 + $0x198] sm:$0xff] %v1594
        %v1599 = vld [vmem:[#allocation2 + $0x8] sm:$0xff]
        %v1600 = vld [vmem:[#allocation2 + $0x10] sm:$0xff]
        %v1601 = vld [vmem:[#allocation2 + $0x18] sm:$0xff]
        %s1602 = scalar_lea.vmem %s393, 50 [#allocation4]
        %v1603 = vld [vmem:[%s1602] ss:$8 sm:$0x3]
        %v1605 = vlaneseq
        %v1606 = vshrl.u32 %v1605, 7
        %v1607 = vsub.s32 0, %v1606
        %v1608 = vrot.slane %v1603, %v1607
        %v1609 = vlaneseq
        %v1610 = vshrl.u32 %v1609, 7
        %v1611 = vsub.s32 1, %v1610
        %v1612 = vrot.slane %v1603, %v1611
        %1613 = vrot.lane.b32.xlu0 %v1608, 73
        %v1614 = vpop.permute.xlu0 %1613
        %1615 = vrot.lane.b32.xlu0 %v1612, 73
        %v1616 = vpop.permute.xlu0 %1615
        %v1617 = vsel %vm598, %v1614, %v1616
        %v1621 = vmul.f32 %v1599, %v1614
        %v1622 = vmul.f32 %v1600, %v1617
        %v1623 = vmul.f32 %v1601, %v1616
        %1627 = vrot.lane.b32.xlu0 %v1621, 55
        %v1628 = vpop.permute.xlu0 %1627
        %1629 = vrot.lane.b32.xlu0 %v1622, 55
        %v1630 = vpop.permute.xlu0 %1629
        %1631 = vrot.lane.b32.xlu0 %v1623, 55
        %v1632 = vpop.permute.xlu0 %1631
        %v1633 = vsel %vm581, %v1628, %v1630
        %v1634 = vsel %vm581, %v1630, %v1632
        %1637 = vst [vmem:[#allocation3 + $0x1a0] sm:$0xff] %v1633
        %1638 = vst [vmem:[#allocation3 + $0x1a8] sm:$0xff] %v1634
        %v1639 = vld [vmem:[%s5] sm:$0xff]
        %v1640 = vld [vmem:[%s5 + $0x8] sm:$0xff]
        %v1641 = vld [vmem:[#allocation3] sm:$0xff]
        %v1642 = vld [vmem:[#allocation3 + $0x8] sm:$0xff]
        %v1643 = vld [vmem:[#allocation3 + $0x10] sm:$0xff]
        %v1644 = vld [vmem:[#allocation3 + $0x18] sm:$0xff]
        %v1645 = vld [vmem:[#allocation3 + $0x20] sm:$0xff]
        %v1646 = vld [vmem:[#allocation3 + $0x28] sm:$0xff]
        %v1647 = vld [vmem:[#allocation3 + $0x30] sm:$0xff]
        %v1648 = vld [vmem:[#allocation3 + $0x38] sm:$0xff]
        %v1649 = vld [vmem:[#allocation3 + $0x40] sm:$0xff]
        %v1650 = vld [vmem:[#allocation3 + $0x48] sm:$0xff]
        %v1651 = vld [vmem:[#allocation3 + $0x50] sm:$0xff]
        %v1652 = vld [vmem:[#allocation3 + $0x58] sm:$0xff]
        %v1653 = vld [vmem:[#allocation3 + $0x60] sm:$0xff]
        %v1654 = vld [vmem:[#allocation3 + $0x68] sm:$0xff]
        %v1655 = vld [vmem:[#allocation3 + $0x70] sm:$0xff]
        %v1656 = vld [vmem:[#allocation3 + $0x78] sm:$0xff]
        %v1657 = vld [vmem:[#allocation3 + $0x80] sm:$0xff]
        %v1658 = vld [vmem:[#allocation3 + $0x88] sm:$0xff]
        %v1659 = vld [vmem:[#allocation3 + $0x90] sm:$0xff]
        %v1660 = vld [vmem:[#allocation3 + $0x98] sm:$0xff]
        %v1661 = vld [vmem:[#allocation3 + $0xa0] sm:$0xff]
        %v1662 = vld [vmem:[#allocation3 + $0xa8] sm:$0xff]
        %v1663 = vld [vmem:[#allocation3 + $0xb0] sm:$0xff]
        %v1664 = vld [vmem:[#allocation3 + $0xb8] sm:$0xff]
        %v1665 = vld [vmem:[#allocation3 + $0xc0] sm:$0xff]
        %v1666 = vld [vmem:[#allocation3 + $0xc8] sm:$0xff]
        %v1667 = vld [vmem:[#allocation3 + $0xd0] sm:$0xff]
        %v1668 = vld [vmem:[#allocation3 + $0xd8] sm:$0xff]
        %v1669 = vld [vmem:[#allocation3 + $0xe0] sm:$0xff]
        %v1670 = vld [vmem:[#allocation3 + $0xe8] sm:$0xff]
        %v1671 = vld [vmem:[#allocation3 + $0xf0] sm:$0xff]
        %v1672 = vld [vmem:[#allocation3 + $0xf8] sm:$0xff]
        %v1673 = vld [vmem:[#allocation3 + $0x100] sm:$0xff]
        %v1674 = vld [vmem:[#allocation3 + $0x108] sm:$0xff]
        %v1675 = vld [vmem:[#allocation3 + $0x110] sm:$0xff]
        %v1676 = vld [vmem:[#allocation3 + $0x118] sm:$0xff]
        %v1677 = vld [vmem:[#allocation3 + $0x120] sm:$0xff]
        %v1678 = vld [vmem:[#allocation3 + $0x128] sm:$0xff]
        %v1679 = vld [vmem:[#allocation3 + $0x130] sm:$0xff]
        %v1680 = vld [vmem:[#allocation3 + $0x138] sm:$0xff]
        %v1681 = vld [vmem:[#allocation3 + $0x140] sm:$0xff]
        %v1682 = vld [vmem:[#allocation3 + $0x148] sm:$0xff]
        %v1683 = vld [vmem:[#allocation3 + $0x150] sm:$0xff]
        %v1684 = vld [vmem:[#allocation3 + $0x158] sm:$0xff]
        %v1685 = vld [vmem:[#allocation3 + $0x160] sm:$0xff]
        %v1686 = vld [vmem:[#allocation3 + $0x168] sm:$0xff]
        %v1687 = vld [vmem:[#allocation3 + $0x170] sm:$0xff]
        %v1688 = vld [vmem:[#allocation3 + $0x178] sm:$0xff]
        %v1689 = vld [vmem:[#allocation3 + $0x180] sm:$0xff]
        %v1690 = vld [vmem:[#allocation3 + $0x188] sm:$0xff]
        %v1691 = vld [vmem:[#allocation3 + $0x190] sm:$0xff]
        %v1692 = vld [vmem:[#allocation3 + $0x198] sm:$0xff]
        %v1693 = vld [vmem:[#allocation3 + $0x1a0] sm:$0xff]
        %v1694 = vld [vmem:[#allocation3 + $0x1a8] sm:$0xff]
        %v1695 = vld [vmem:[%s6] sm:$0xff]
        %1697 = vset.pattern.permute.xlu0 0
        %1698 = vperm.xlu0 %1697, %v1695
        %v1699 = vpop.permute.xlu0 %1698
        %vm1701 = vcmask 719872
        %v1703 = vsel %vm1701, %v1640, 0
        %1705 = vmatprep.subr.mxu0 %v1642
        %1706 = vmatpush1.msra.mxu0 %v1641
        %1707 = vmatprep.subr.mxu0 %v1644
        %1708 = vmatpush1.msra.mxu0 %v1643
        %1709 = vmatprep.subr.mxu0 %v1646
        %1710 = vmatpush1.msra.mxu0 %v1645
        %1711 = vmatprep.subr.mxu0 %v1648
        %1712 = vmatpush1.msra.mxu0 %v1647
        %1713 = vmatprep.subr.mxu0 %v1650
        %1714 = vmatpush1.msra.mxu0 %v1649
        %1715 = vmatprep.subr.mxu0 %v1652
        %1716 = vmatpush1.msra.mxu0 %v1651
        %1717 = vmatprep.subr.mxu0 %v1654
        %1718 = vmatpush1.msra.mxu0 %v1653
        %1719 = vmatprep.subr.mxu0 %v1656
        %1720 = vmatpush1.msra.mxu0 %v1655
        %1721 = vmatprep.subr.mxu0 %v1658
        %1722 = vmatpush1.msra.mxu0 %v1657
        %1723 = vmatprep.subr.mxu0 %v1660
        %1724 = vmatpush1.msra.mxu0 %v1659
        %1725 = vmatprep.subr.mxu0 %v1662
        %1726 = vmatpush1.msra.mxu0 %v1661
        %1727 = vmatprep.subr.mxu0 %v1664
        %1728 = vmatpush1.msra.mxu0 %v1663
        %1729 = vmatprep.subr.mxu0 %v1666
        %1730 = vmatpush1.msra.mxu0 %v1665
        %1731 = vmatprep.subr.mxu0 %v1668
        %1732 = vmatpush1.msra.mxu0 %v1667
        %1733 = vmatprep.subr.mxu0 %v1670
        %1734 = vmatpush1.msra.mxu0 %v1669
        %1735 = vmatprep.subr.mxu0 %v1672
        %1736 = vmatpush1.msra.mxu0 %v1671
        %1737 = vmatprep.subr.mxu0 %v1674
        %1738 = vmatpush1.msra.mxu0 %v1673
        %1739 = vmatprep.subr.mxu0 %v1676
        %1740 = vmatpush1.msra.mxu0 %v1675
        %1741 = vmatprep.subr.mxu0 %v1678
        %1742 = vmatpush1.msra.mxu0 %v1677
        %1743 = vmatprep.subr.mxu0 %v1680
        %1744 = vmatpush1.msra.mxu0 %v1679
        %1745 = vmatprep.subr.mxu0 %v1682
        %1746 = vmatpush1.msra.mxu0 %v1681
        %1747 = vmatprep.subr.mxu0 %v1684
        %1748 = vmatpush1.msra.mxu0 %v1683
        %1749 = vmatprep.subr.mxu0 %v1686
        %1750 = vmatpush1.msra.mxu0 %v1685
        %1751 = vmatprep.subr.mxu0 %v1688
        %1752 = vmatpush1.msra.mxu0 %v1687
        %1753 = vmatprep.subr.mxu0 %v1690
        %1754 = vmatpush1.msra.mxu0 %v1689
        %1755 = vmatprep.subr.mxu0 %v1692
        %1756 = vmatpush1.msra.mxu0 %v1691
        %1757 = vmatprep.subr.mxu0 %v1694
        %1758 = vmatpush1.msra.mxu0 %v1693
        %1759 = vmatprep.subr.mxu0 0.0
        %1760 = vmatpush1.msra.mxu0 0.0
        %1761 = vmatprep.subr.mxu0 0.0
        %1762 = vmatpush1.msra.mxu0 0.0
        %1763 = vmatprep.subr.mxu0 0.0
        %1764 = vmatpush1.msra.mxu0 0.0
        %1765 = vmatprep.subr.mxu0 0.0
        %1766 = vmatpush1.msra.mxu0 0.0
        %1767 = vmatprep.subr.mxu0 0.0
        %1768 = vmatpush1.msra.mxu0 0.0
        %1769 = vmatprep.mubr.f32.mxu0 %v1703
        %1770 = vmatmul.mubr.f32.gmra.mrb[0].mxu0 %v1639
        %v1771 = vpop.f32.mrb[0].mxu0
        %v1772 = vadd.f32 %v1699, %v1771
        %v1773 = vpop.f32.mrb[0].mxu0
        %v1774 = vadd.f32 %v1699, %v1773
        %1775 = vdwg.mxu0
        %v1776 = vld [vmem:[%s485] sm:$0xff]
        %v1777 = vld [vmem:[%s485 + $0x8] sm:$0xff]
        %v1778 = vadd.f32 %v1772, %v1776
        %v1779 = vadd.f32 %v1774, %v1777
        %1780 = vst [vmem:[%s512] sm:$0xff] %v1778
        %1781 = vst [vmem:[%s512 + $0x8] sm:$0xff] %v1779
        %s1782 = smul.u32 2, %s24
        %p1783 = scmp.lt.s32.totalorder %s23, 1
        %s1784 = scalar_select %p1783, %s23, 1
        %p1785 = scmp.lt.s32.totalorder %s1782, 3
        %s1786 = scalar_select %p1785, %s1782, 3
        %s1787 = smul.addr %s1784, 4
        %s1788 = sadd.s32 %s1786, %s1787
        %s1789 = smul.addr %s1788, 8
        %s1790 = scalar_lea.vmem %s8, %s1789
        // Predicated region
        $region92: #{res_module_forward.1} parent=70 // pred_check
          %p1791 = pneg %p257
        $region93: #{res_module_forward.1} parent=70 // pred_check_branch
          %1793 = sbr.rel (%p1791) target = $region95
        $region94: #{res_module_forward.1} parent=70 // pred_region
          %s1794 = smul.u32 2, %s24
        $region95: #{res_module_forward.1} parent=70 // pred_fallthru
          _
      $region71: #{res_module_forward.1} parent=5 // pred_fallthru
        _
      %p1795 = scmp.le.s32.totalorder 2, %s14
      // Predicated region
      $region96: #{res_module_forward.1} parent=5 // pred_check
        %p1796 = pneg %p1795
      $region97: #{res_module_forward.1} parent=5 // pred_check_branch
        %1798 = sbr.rel (%p1796) target = $region99
      $region98: #{res_module_forward.1} parent=5 // pred_region
        %s1799 = ssub.s32 %s14, 2
        // Predicated region
        $region100: #{res_module_forward.1} parent=98 // pred_check
          %p1800 = pneg %p263
        $region101: #{res_module_forward.1} parent=98 // pred_check_branch
          %1802 = sbr.rel (%p1800) target = $region103
        $region102: #{res_module_forward.1} parent=98 // pred_region
          %s1803 = smul.u32 2, %s26
          %p1804 = scmp.lt.s32.totalorder %s25, 1
          %s1805 = scalar_select %p1804, %s25, 1
          %p1806 = scmp.lt.s32.totalorder %s1803, 3
          %s1807 = scalar_select %p1806, %s1803, 3
          %s1808 = smul.addr %s1805, 4
          %s1809 = sadd.s32 %s1807, %s1808
          %s1810 = smul.addr %s1809, 8
          %s1811 = scalar_lea.vmem %s8, %s1810
        $region103: #{res_module_forward.1} parent=98 // pred_fallthru
          _
      $region99: #{res_module_forward.1} parent=5 // pred_fallthru
        _
    $region6: #{res_module_forward.1} parent=1 // loop_footer
      %s18 = sadd.s32 1, %s14
    $region7: #{res_module_forward.1} parent=1 // loop_footer_branch
      %13 = sbr.rel target = $region3
    $region8: #{res_module_forward.1} parent=1 // loop_exit
      _

</llo_original>
